<compile_context>
chip_gen: v7x
topology: tpu7x:2x2x1
jax: 0.10.0
libtpu: 0.0.40
codegen_flags: <defaults>
</compile_context>

<pallas_src>
import functools
import math

import numpy as np
import jax
import jax.numpy as jnp
from jax.experimental import pallas as pl
from jax.experimental.pallas import tpu as pltpu


# ---------------------------------------------------------------------------
# helpers shared by kernel and reference
# ---------------------------------------------------------------------------

def _layernorm(x, g, b, eps):
    mu = jnp.mean(x, axis=-1, keepdims=True)
    var = jnp.mean(jnp.square(x - mu), axis=-1, keepdims=True)
    return (x - mu) * jax.lax.rsqrt(var + eps) * g + b


def _pick_vmem_limit_bytes():
    """Per-chip scoped-VMEM budget: ~3/4 of physical (48 MiB v7x, 96 MiB v5e/v6e)."""
    cap = 128 * 1024 * 1024
    try:
        info = pltpu.get_tpu_info()
        cap = int(getattr(info, "vmem_capacity_bytes", cap) or cap)
    except Exception:
        pass
    return int(min(cap * 3 // 4, 100 * 1024 * 1024))


# ---------------------------------------------------------------------------
# fused encoder-block Pallas kernel (one grid step = TILE_B full sequences)
# ---------------------------------------------------------------------------

def _encoder_block_kernel(x_ref, wqkv_ref, bqkv_ref, wo_ref, bo_ref,
                          ln1g_ref, ln1b_ref,
                          w1_ref, fb1_ref, w2_ref, fb2_ref,
                          ln2g_ref, ln2b_ref,
                          o_ref, ctx_ref,
                          *, num_heads, head_dim, eps):
    TB, S, D = x_ref.shape
    M = TB * S
    mm = jnp.bfloat16                      # matmul operand dtype (f32 accumulate)

    x = x_ref[...]                         # (TB, S, D) float32
    x2 = x.reshape(M, D)
    xb = x2.astype(mm)

    # ---- Q/K/V projections: major-axis indexed (3, D, D) weight stack --------
    # 1/sqrt(head_dim) is already folded into wqkv[0]/bqkv[0] at the boundary.
    q = jnp.dot(xb, wqkv_ref[0], preferred_element_type=jnp.float32) + bqkv_ref[0]
    k = jnp.dot(xb, wqkv_ref[1], preferred_element_type=jnp.float32) + bqkv_ref[1]
    v = jnp.dot(xb, wqkv_ref[2], preferred_element_type=jnp.float32) + bqkv_ref[2]
    q = q.reshape(TB, S, D)
    k = k.reshape(TB, S, D)
    v = v.reshape(TB, S, D)

    # ---- in-kernel additive causal mask (0 / -1e30), pure structure ----------
    rows = jax.lax.broadcasted_iota(jnp.int32, (S, S), 0)
    cols = jax.lax.broadcasted_iota(jnp.int32, (S, S), 1)
    addmask = jnp.where(cols > rows, jnp.float32(-1e30), jnp.float32(0.0))[None]

    # ---- per-head attention; ctx written into a VMEM scratch slab ------------
    # (scores are accumulated and softmax'd in f32; see correctness notes)
    for h in range(num_heads):
        lo = h * head_dim
        qh = q[:, :, lo:lo + head_dim].astype(mm)
        kh = k[:, :, lo:lo + head_dim].astype(mm)
        vh = v[:, :, lo:lo + head_dim].astype(mm)
        s = jnp.einsum("bqd,bkd->bqk", qh, kh,
                       preferred_element_type=jnp.float32) + addmask   # (TB, S, S)
        s_max = jnp.max(s, axis=-1, keepdims=True)
        e = jnp.exp(s - s_max)
        p = e * pl.reciprocal(jnp.sum(e, axis=-1, keepdims=True), approx=True)
        ctx_h = jnp.einsum("bqk,bkd->bqd", p.astype(mm), vh,
                           preferred_element_type=jnp.float32)          # (TB, S, hd)
        ctx_ref[:, lo:lo + head_dim] = ctx_h.reshape(M, head_dim)

    # ---- lane-dense output projection + residual + LayerNorm1 ----------------
    attn = jnp.dot(ctx_ref[...].astype(mm), wo_ref[...],
                   preferred_element_type=jnp.float32) + bo_ref[...]
    y = _layernorm(attn + x2, ln1g_ref[...], ln1b_ref[...], eps)

    # ---- FFN + residual + LayerNorm2 (f32 epilogue) ---------------------------
    h1 = jnp.maximum(jnp.dot(y.astype(mm), w1_ref[...],
                             preferred_element_type=jnp.float32) + fb1_ref[...], 0.0)
    z = jnp.dot(h1.astype(mm), w2_ref[...],
                preferred_element_type=jnp.float32) + fb2_ref[...] + y
    z = _layernorm(z, ln2g_ref[...], ln2b_ref[...], eps)

    o_ref[...] = z.reshape(TB, S, D)


def encoder_block_pallas(x, p, num_heads, eps=1e-5, tile_b=None):
    """x: (B, S, D) embedded input (embeddings + positional encoding already added)."""
    B, S, D = x.shape
    head_dim = D // num_heads

    if tile_b is None:
        # Target >= 256 activation rows per grid step (256-deep MXU on v6e/v7x;
        # 128 is the natural granule on v5e), bounded by B.  Production sizing
        # would also bound this by the VMEM budget: 6*D^2 bf16 resident weights
        # + 2x double-buffered (tile_b*S, D) input + output + attention set.
        tile_b = max(1, min(B, pl.cdiv(256, S)))
    while B % tile_b:
        tile_b -= 1
    grid = (B // tile_b,)
    M = tile_b * S

    wdt = jnp.bfloat16
    scale = jnp.float32(1.0 / math.sqrt(head_dim))
    # one-time weight transform: fold the attention scale into Q weights/bias
    wqkv = p["wqkv"].at[0].multiply(scale).astype(wdt)   # (3, D, D) bf16
    bqkv = p["bqkv"].at[0].multiply(scale)               # (3, 1, D) f32

    weights = (wqkv, bqkv,
               p["wo"].astype(wdt), p["bo"],
               p["ln1_g"], p["ln1_b"],
               p["w1"].astype(wdt), p["b1"],
               p["w2"].astype(wdt), p["b2"],
               p["ln2_g"], p["ln2_b"])

    def resident(a):  # constant index_map -> block is not re-fetched per grid step
        return pl.BlockSpec(a.shape, lambda i, _nd=a.ndim: (0,) * _nd)

    in_specs = [pl.BlockSpec((tile_b, S, D), lambda i: (i, 0, 0))]  # streamed x
    in_specs += [resident(w) for w in weights]
    out_spec = pl.BlockSpec((tile_b, S, D), lambda i: (i, 0, 0))

    # advisory cost hint for the XLA scheduler
    flops = 12 * B * S * D * D + 4 * B * S * S * D
    transcendentals = B * num_heads * S * S
    bytes_accessed = 2 * B * S * D * 4 + 6 * D * D * 2 + 16 * D * 4

    kern = functools.partial(_encoder_block_kernel,
                             num_heads=num_heads, head_dim=head_dim, eps=eps)

    return pl.pallas_call(
        kern,
        out_shape=jax.ShapeDtypeStruct((B, S, D), jnp.float32),
        grid_spec=pltpu.PrefetchScalarGridSpec(
            num_scalar_prefetch=0,
            grid=grid,
            in_specs=in_specs,
            out_specs=out_spec,
            scratch_shapes=[pltpu.VMEM((M, D), jnp.float32)],   # per-head ctx slab
        ),
        compiler_params=pltpu.CompilerParams(
            dimension_semantics=("parallel",),                  # v7x: 2 TCs share tiles
            vmem_limit_bytes=_pick_vmem_limit_bytes(),
        ),
        cost_estimate=pl.CostEstimate(flops=flops,
                                      transcendentals=transcendentals,
                                      bytes_accessed=bytes_accessed),
    )(x, *weights)


# ---------------------------------------------------------------------------
# pure-JAX reference (same bf16 matmul-operand policy, exact softmax)
# ---------------------------------------------------------------------------

def encoder_block_ref(x, p, num_heads, eps=1e-5):
    mm = jnp.bfloat16
    B, S, D = x.shape
    hd = D // num_heads
    x2 = x.reshape(B * S, D)
    scale = 1.0 / math.sqrt(hd)

    def proj(w, b):
        return jnp.dot(x2.astype(mm), w.astype(mm),
                       preferred_element_type=jnp.float32) + b

    q = (proj(p["wqkv"][0], p["bqkv"][0]) * scale).reshape(B, S, D)
    k = proj(p["wqkv"][1], p["bqkv"][1]).reshape(B, S, D)
    v = proj(p["wqkv"][2], p["bqkv"][2]).reshape(B, S, D)

    addmask = jnp.where(jnp.triu(jnp.ones((S, S), jnp.float32), k=1) > 0,
                        jnp.float32(-1e30), jnp.float32(0.0))[None]
    ctxs = []
    for h in range(num_heads):
        lo, hi = h * hd, (h + 1) * hd
        s = jnp.einsum("bqd,bkd->bqk", q[..., lo:hi].astype(mm),
                       k[..., lo:hi].astype(mm),
                       preferred_element_type=jnp.float32) + addmask
        pr = jax.nn.softmax(s, axis=-1)
        ctxs.append(jnp.einsum("bqk,bkd->bqd", pr.astype(mm),
                               v[..., lo:hi].astype(mm),
                               preferred_element_type=jnp.float32))
    ctx = jnp.concatenate(ctxs, axis=-1).reshape(B * S, D)
    attn = jnp.dot(ctx.astype(mm), p["wo"].astype(mm),
                   preferred_element_type=jnp.float32) + p["bo"]
    y = _layernorm(attn + x2, p["ln1_g"], p["ln1_b"], eps)
    h1 = jnp.maximum(jnp.dot(y.astype(mm), p["w1"].astype(mm),
                             preferred_element_type=jnp.float32) + p["b1"], 0.0)
    z = jnp.dot(h1.astype(mm), p["w2"].astype(mm),
                preferred_element_type=jnp.float32) + p["b2"] + y
    z = _layernorm(z, p["ln2_g"], p["ln2_b"], eps)
    return z.reshape(B, S, D)


# ---------------------------------------------------------------------------
# deterministic parameter / constant construction (outside the kernel)
# ---------------------------------------------------------------------------

def make_pos_embedding(seq_len, dim):
    # Faithful reproduction of the module's position_encoding formula (even dim).
    pe = np.zeros((seq_len, dim), dtype=np.float64)
    for pos in range(seq_len):
        for i in range(0, dim, 2):
            pe[pos, i] = math.sin(pos / 10000 ** (2 * i / dim))
            if i + 1 < dim:
                pe[pos, i + 1] = math.cos(pos / 10000 ** (2 * i / dim))
    return jnp.asarray(pe, dtype=jnp.float32)


def init_params(key, dim, total_ex, total_cat):
    keys = iter(jax.random.split(key, 16))

    def nrm(shape, scale=0.1):
        return jax.random.normal(next(keys), shape, jnp.float32) * scale

    return dict(
        embd_ex=nrm((total_ex, dim), 1.0),
        embd_cat=nrm((total_cat, dim), 1.0),
        wqkv=nrm((3, dim, dim)),            # stacked (Wq, Wk, Wv): out = x @ W + b
        bqkv=nrm((3, 1, dim)),
        wo=nrm((dim, dim)), bo=nrm((1, dim)),
        w1=nrm((dim, dim)), b1=nrm((1, dim)),
        w2=nrm((dim, dim)), b2=nrm((1, dim)),
        ln1_g=jnp.ones((1, dim), jnp.float32), ln1_b=jnp.zeros((1, dim), jnp.float32),
        ln2_g=jnp.ones((1, dim), jnp.float32), ln2_b=jnp.zeros((1, dim), jnp.float32),
    )


# ---------------------------------------------------------------------------

if __name__ == "__main__":
    B, S, D, H = 2, 8, 32, 4
    total_ex, total_cat = 50, 10

    key = jax.random.PRNGKey(0)
    pkey, k1, k2 = jax.random.split(key, 3)
    params = init_params(pkey, D, total_ex, total_cat)

    in_ex = jax.random.randint(k1, (B, S), 0, total_ex)
    in_cat = jax.random.randint(k2, (B, S), 0, total_cat)

    # first_block=True path: embedding gathers + positional embedding in plain
    # JAX outside the kernel (dropout = identity at inference).
    pos = make_pos_embedding(S, D)
    x = params["embd_ex"][in_ex] + params["embd_cat"][in_cat] + pos[None]

    # tile_b=1 -> grid=(2,): exercises the streaming BlockSpecs / resident weights.
    out = encoder_block_pallas(x, params, H, tile_b=1)
    out = jax.block_until_ready(out)

    ref = encoder_block_ref(x, params, H)
    ref = jax.block_until_ready(ref)

    assert out.shape == (B, S, D), out.shape
    np.testing.assert_allclose(np.asarray(out), np.asarray(ref), rtol=2e-2, atol=2e-2)
    print("KERNEL_OK")
</pallas_src>

<mosaic_0001>
module attributes {stable_mosaic.version = 11 : i64} {
  func.func @_encoder_block_kernel(%arg0: i32, %arg1: memref<1x8x32xf32, #tpu.memory_space<vmem>>, %arg2: memref<3x32x32xbf16, #tpu.memory_space<vmem>>, %arg3: memref<3x1x32xf32, #tpu.memory_space<vmem>>, %arg4: memref<32x32xbf16, #tpu.memory_space<vmem>>, %arg5: memref<1x32xf32, #tpu.memory_space<vmem>>, %arg6: memref<1x32xf32, #tpu.memory_space<vmem>>, %arg7: memref<1x32xf32, #tpu.memory_space<vmem>>, %arg8: memref<32x32xbf16, #tpu.memory_space<vmem>>, %arg9: memref<1x32xf32, #tpu.memory_space<vmem>>, %arg10: memref<32x32xbf16, #tpu.memory_space<vmem>>, %arg11: memref<1x32xf32, #tpu.memory_space<vmem>>, %arg12: memref<1x32xf32, #tpu.memory_space<vmem>>, %arg13: memref<1x32xf32, #tpu.memory_space<vmem>>, %arg14: memref<1x8x32xf32, #tpu.memory_space<vmem>>, %arg15: memref<8x32xf32, #tpu.memory_space<vmem>>) attributes {dimension_semantics = [#tpu.dimension_semantics<parallel>], iteration_bounds = array<i64: 2>, scalar_prefetch = 0 : i64, scratch_operands = 1 : i64, tpu.core_type = #tpu.core_type<tc>, window_params = [{transform_indices = @transform_0, window_bounds = array<i64: 1, 8, 32>}, {pipeline_mode = #tpu.pipeline_mode<synchronous>, transform_indices = @transform_1, window_bounds = array<i64: 3, 32, 32>}, {pipeline_mode = #tpu.pipeline_mode<synchronous>, transform_indices = @transform_2, window_bounds = array<i64: 3, 1, 32>}, {pipeline_mode = #tpu.pipeline_mode<synchronous>, transform_indices = @transform_3, window_bounds = array<i64: 32, 32>}, {pipeline_mode = #tpu.pipeline_mode<synchronous>, transform_indices = @transform_4, window_bounds = array<i64: 1, 32>}, {pipeline_mode = #tpu.pipeline_mode<synchronous>, transform_indices = @transform_5, window_bounds = array<i64: 1, 32>}, {pipeline_mode = #tpu.pipeline_mode<synchronous>, transform_indices = @transform_6, window_bounds = array<i64: 1, 32>}, {pipeline_mode = #tpu.pipeline_mode<synchronous>, transform_indices = @transform_7, window_bounds = array<i64: 32, 32>}, {pipeline_mode = #tpu.pipeline_mode<synchronous>, transform_indices = @transform_8, window_bounds = array<i64: 1, 32>}, {pipeline_mode = #tpu.pipeline_mode<synchronous>, transform_indices = @transform_9, window_bounds = array<i64: 32, 32>}, {pipeline_mode = #tpu.pipeline_mode<synchronous>, transform_indices = @transform_10, window_bounds = array<i64: 1, 32>}, {pipeline_mode = #tpu.pipeline_mode<synchronous>, transform_indices = @transform_11, window_bounds = array<i64: 1, 32>}, {pipeline_mode = #tpu.pipeline_mode<synchronous>, transform_indices = @transform_12, window_bounds = array<i64: 1, 32>}, {transform_indices = @transform_13, window_bounds = array<i64: 1, 8, 32>}]} {
    %c0 = arith.constant 0 : index
    %c0_0 = arith.constant 0 : index
    %c0_1 = arith.constant 0 : index
    %0 = vector.load %arg1[%c0, %c0_0, %c0_1] : memref<1x8x32xf32, #tpu.memory_space<vmem>>, vector<1x8x32xf32>
    %1 = vector.shape_cast %0 : vector<1x8x32xf32> to vector<8x32xf32>
    %2 = arith.truncf %1 : vector<8x32xf32> to vector<8x32xbf16>
    %c0_2 = arith.constant 0 : index
    %c0_3 = arith.constant 0 : index
    %c0_4 = arith.constant 0 : index
    %3 = vector.load %arg2[%c0_2, %c0_3, %c0_4] : memref<3x32x32xbf16, #tpu.memory_space<vmem>>, vector<1x32x32xbf16>
    %4 = vector.shape_cast %3 : vector<1x32x32xbf16> to vector<32x32xbf16>
    %cst = arith.constant dense<0.000000e+00> : vector<8x32xf32>
    %5 = tpu.matmul %2, %4, %cst {dimension_numbers = #tpu.dot_dimension_numbers<[1], [0], [0], [1], [0, 0, 1, 1], [], []>} : vector<8x32xbf16>, vector<32x32xbf16>, vector<8x32xf32> -> vector<8x32xf32>
    %c0_5 = arith.constant 0 : index
    %c0_6 = arith.constant 0 : index
    %c0_7 = arith.constant 0 : index
    %6 = vector.load %arg3[%c0_5, %c0_6, %c0_7] : memref<3x1x32xf32, #tpu.memory_space<vmem>>, vector<1x1x32xf32>
    %7 = vector.shape_cast %6 : vector<1x1x32xf32> to vector<1x32xf32>
    %8 = vector.broadcast %7 : vector<1x32xf32> to vector<8x32xf32>
    %9 = arith.addf %5, %8 : vector<8x32xf32>
    %c1 = arith.constant 1 : index
    %c0_8 = arith.constant 0 : index
    %c0_9 = arith.constant 0 : index
    %10 = vector.load %arg2[%c1, %c0_8, %c0_9] : memref<3x32x32xbf16, #tpu.memory_space<vmem>>, vector<1x32x32xbf16>
    %11 = vector.shape_cast %10 : vector<1x32x32xbf16> to vector<32x32xbf16>
    %cst_10 = arith.constant dense<0.000000e+00> : vector<8x32xf32>
    %12 = tpu.matmul %2, %11, %cst_10 {dimension_numbers = #tpu.dot_dimension_numbers<[1], [0], [0], [1], [0, 0, 1, 1], [], []>} : vector<8x32xbf16>, vector<32x32xbf16>, vector<8x32xf32> -> vector<8x32xf32>
    %c1_11 = arith.constant 1 : index
    %c0_12 = arith.constant 0 : index
    %c0_13 = arith.constant 0 : index
    %13 = vector.load %arg3[%c1_11, %c0_12, %c0_13] : memref<3x1x32xf32, #tpu.memory_space<vmem>>, vector<1x1x32xf32>
    %14 = vector.shape_cast %13 : vector<1x1x32xf32> to vector<1x32xf32>
    %15 = vector.broadcast %14 : vector<1x32xf32> to vector<8x32xf32>
    %16 = arith.addf %12, %15 : vector<8x32xf32>
    %c2 = arith.constant 2 : index
    %c0_14 = arith.constant 0 : index
    %c0_15 = arith.constant 0 : index
    %17 = vector.load %arg2[%c2, %c0_14, %c0_15] : memref<3x32x32xbf16, #tpu.memory_space<vmem>>, vector<1x32x32xbf16>
    %18 = vector.shape_cast %17 : vector<1x32x32xbf16> to vector<32x32xbf16>
    %cst_16 = arith.constant dense<0.000000e+00> : vector<8x32xf32>
    %19 = tpu.matmul %2, %18, %cst_16 {dimension_numbers = #tpu.dot_dimension_numbers<[1], [0], [0], [1], [0, 0, 1, 1], [], []>} : vector<8x32xbf16>, vector<32x32xbf16>, vector<8x32xf32> -> vector<8x32xf32>
    %c2_17 = arith.constant 2 : index
    %c0_18 = arith.constant 0 : index
    %c0_19 = arith.constant 0 : index
    %20 = vector.load %arg3[%c2_17, %c0_18, %c0_19] : memref<3x1x32xf32, #tpu.memory_space<vmem>>, vector<1x1x32xf32>
    %21 = vector.shape_cast %20 : vector<1x1x32xf32> to vector<1x32xf32>
    %22 = vector.broadcast %21 : vector<1x32xf32> to vector<8x32xf32>
    %23 = arith.addf %19, %22 : vector<8x32xf32>
    %24 = vector.shape_cast %9 : vector<8x32xf32> to vector<1x8x32xf32>
    %25 = vector.shape_cast %16 : vector<8x32xf32> to vector<1x8x32xf32>
    %26 = vector.shape_cast %23 : vector<8x32xf32> to vector<1x8x32xf32>
    %27 = tpu.iota {dimensions = array<i32: 0>} : vector<8x8xi32>
    %28 = tpu.iota {dimensions = array<i32: 1>} : vector<8x8xi32>
    %29 = arith.cmpi sgt, %28, %27 : vector<8x8xi32>
    %cst_20 = arith.constant -1.000000e+30 : f32
    %cst_21 = arith.constant 0.000000e+00 : f32
    %30 = vector.broadcast %cst_20 : f32 to vector<8x8xf32>
    %31 = vector.broadcast %cst_21 : f32 to vector<8x8xf32>
    %32 = arith.select %29, %30, %31 : vector<8x8xi1>, vector<8x8xf32>
    %33 = vector.shape_cast %32 : vector<8x8xf32> to vector<1x8x8xf32>
    %34 = vector.extract_strided_slice %24 {offsets = [0, 0, 0], sizes = [1, 8, 8], strides = [1, 1, 1]} : vector<1x8x32xf32> to vector<1x8x8xf32>
    %35 = arith.truncf %34 : vector<1x8x8xf32> to vector<1x8x8xbf16>
    %36 = vector.extract_strided_slice %25 {offsets = [0, 0, 0], sizes = [1, 8, 8], strides = [1, 1, 1]} : vector<1x8x32xf32> to vector<1x8x8xf32>
    %37 = arith.truncf %36 : vector<1x8x8xf32> to vector<1x8x8xbf16>
    %38 = vector.extract_strided_slice %26 {offsets = [0, 0, 0], sizes = [1, 8, 8], strides = [1, 1, 1]} : vector<1x8x32xf32> to vector<1x8x8xf32>
    %39 = arith.truncf %38 : vector<1x8x8xf32> to vector<1x8x8xbf16>
    "tpu.trace_start"() <{level = 10 : i32, message = "bqd,bkd->bqk"}> : () -> ()
    %cst_22 = arith.constant dense<0.000000e+00> : vector<1x8x8xf32>
    %40 = tpu.matmul %35, %37, %cst_22 {dimension_numbers = #tpu.dot_dimension_numbers<[2], [2], [1], [1], [0, 0, 0, 1, 1, 1], [0], [0]>} : vector<1x8x8xbf16>, vector<1x8x8xbf16>, vector<1x8x8xf32> -> vector<1x8x8xf32>
    "tpu.trace_stop"() : () -> ()
    %41 = arith.addf %40, %33 : vector<1x8x8xf32>
    %cst_23 = arith.constant dense<0xFF800000> : vector<1x8xf32>
    %42 = vector.multi_reduction <maximumf>, %41, %cst_23 [2] : vector<1x8x8xf32> to vector<1x8xf32>
    %43 = vector.shape_cast %42 : vector<1x8xf32> to vector<1x8x1xf32>
    %44 = vector.broadcast %43 : vector<1x8x1xf32> to vector<1x8x8xf32>
    %45 = arith.subf %41, %44 : vector<1x8x8xf32>
    %46 = math.exp %45 : vector<1x8x8xf32>
    %cst_24 = arith.constant dense<0.000000e+00> : vector<1x8xf32>
    %47 = vector.multi_reduction <add>, %46, %cst_24 [2] : vector<1x8x8xf32> to vector<1x8xf32>
    %48 = vector.shape_cast %47 : vector<1x8xf32> to vector<1x8x1xf32>
    %49 = tpu.reciprocal %48 {approx = true} : vector<1x8x1xf32> -> vector<1x8x1xf32>
    %50 = vector.broadcast %49 : vector<1x8x1xf32> to vector<1x8x8xf32>
    %51 = arith.mulf %46, %50 : vector<1x8x8xf32>
    %52 = arith.truncf %51 : vector<1x8x8xf32> to vector<1x8x8xbf16>
    "tpu.trace_start"() <{level = 10 : i32, message = "bqk,bkd->bqd"}> : () -> ()
    %cst_25 = arith.constant dense<0.000000e+00> : vector<1x8x8xf32>
    %53 = tpu.matmul %52, %39, %cst_25 {dimension_numbers = #tpu.dot_dimension_numbers<[2], [1], [1], [2], [0, 0, 0, 1, 1, 2], [0], [0]>} : vector<1x8x8xbf16>, vector<1x8x8xbf16>, vector<1x8x8xf32> -> vector<1x8x8xf32>
    "tpu.trace_stop"() : () -> ()
    %54 = vector.shape_cast %53 : vector<1x8x8xf32> to vector<8x8xf32>
    %c0_26 = arith.constant 0 : index
    %c0_27 = arith.constant 0 : index
    %55 = vector.load %arg15[%c0_26, %c0_27] : memref<8x32xf32, #tpu.memory_space<vmem>>, vector<8x8xf32>
    tpu.vector_store %arg15[%c0_26, %c0_27], %54 {strides = array<i32>} : memref<8x32xf32, #tpu.memory_space<vmem>>, vector<8x8xf32>,
    %56 = vector.extract_strided_slice %24 {offsets = [0, 0, 8], sizes = [1, 8, 8], strides = [1, 1, 1]} : vector<1x8x32xf32> to vector<1x8x8xf32>
    %57 = arith.truncf %56 : vector<1x8x8xf32> to vector<1x8x8xbf16>
    %58 = vector.extract_strided_slice %25 {offsets = [0, 0, 8], sizes = [1, 8, 8], strides = [1, 1, 1]} : vector<1x8x32xf32> to vector<1x8x8xf32>
    %59 = arith.truncf %58 : vector<1x8x8xf32> to vector<1x8x8xbf16>
    %60 = vector.extract_strided_slice %26 {offsets = [0, 0, 8], sizes = [1, 8, 8], strides = [1, 1, 1]} : vector<1x8x32xf32> to vector<1x8x8xf32>
    %61 = arith.truncf %60 : vector<1x8x8xf32> to vector<1x8x8xbf16>
    "tpu.trace_start"() <{level = 10 : i32, message = "bqd,bkd->bqk"}> : () -> ()
    %cst_28 = arith.constant dense<0.000000e+00> : vector<1x8x8xf32>
    %62 = tpu.matmul %57, %59, %cst_28 {dimension_numbers = #tpu.dot_dimension_numbers<[2], [2], [1], [1], [0, 0, 0, 1, 1, 1], [0], [0]>} : vector<1x8x8xbf16>, vector<1x8x8xbf16>, vector<1x8x8xf32> -> vector<1x8x8xf32>
    "tpu.trace_stop"() : () -> ()
    %63 = arith.addf %62, %33 : vector<1x8x8xf32>
    %cst_29 = arith.constant dense<0xFF800000> : vector<1x8xf32>
    %64 = vector.multi_reduction <maximumf>, %63, %cst_29 [2] : vector<1x8x8xf32> to vector<1x8xf32>
    %65 = vector.shape_cast %64 : vector<1x8xf32> to vector<1x8x1xf32>
    %66 = vector.broadcast %65 : vector<1x8x1xf32> to vector<1x8x8xf32>
    %67 = arith.subf %63, %66 : vector<1x8x8xf32>
    %68 = math.exp %67 : vector<1x8x8xf32>
    %cst_30 = arith.constant dense<0.000000e+00> : vector<1x8xf32>
    %69 = vector.multi_reduction <add>, %68, %cst_30 [2] : vector<1x8x8xf32> to vector<1x8xf32>
    %70 = vector.shape_cast %69 : vector<1x8xf32> to vector<1x8x1xf32>
    %71 = tpu.reciprocal %70 {approx = true} : vector<1x8x1xf32> -> vector<1x8x1xf32>
    %72 = vector.broadcast %71 : vector<1x8x1xf32> to vector<1x8x8xf32>
    %73 = arith.mulf %68, %72 : vector<1x8x8xf32>
    %74 = arith.truncf %73 : vector<1x8x8xf32> to vector<1x8x8xbf16>
    "tpu.trace_start"() <{level = 10 : i32, message = "bqk,bkd->bqd"}> : () -> ()
    %cst_31 = arith.constant dense<0.000000e+00> : vector<1x8x8xf32>
    %75 = tpu.matmul %74, %61, %cst_31 {dimension_numbers = #tpu.dot_dimension_numbers<[2], [1], [1], [2], [0, 0, 0, 1, 1, 2], [0], [0]>} : vector<1x8x8xbf16>, vector<1x8x8xbf16>, vector<1x8x8xf32> -> vector<1x8x8xf32>
    "tpu.trace_stop"() : () -> ()
    %76 = vector.shape_cast %75 : vector<1x8x8xf32> to vector<8x8xf32>
    %c0_32 = arith.constant 0 : index
    %c8 = arith.constant 8 : index
    %77 = vector.load %arg15[%c0_32, %c8] : memref<8x32xf32, #tpu.memory_space<vmem>>, vector<8x8xf32>
    tpu.vector_store %arg15[%c0_32, %c8], %76 {strides = array<i32>} : memref<8x32xf32, #tpu.memory_space<vmem>>, vector<8x8xf32>,
    %78 = vector.extract_strided_slice %24 {offsets = [0, 0, 16], sizes = [1, 8, 8], strides = [1, 1, 1]} : vector<1x8x32xf32> to vector<1x8x8xf32>
    %79 = arith.truncf %78 : vector<1x8x8xf32> to vector<1x8x8xbf16>
    %80 = vector.extract_strided_slice %25 {offsets = [0, 0, 16], sizes = [1, 8, 8], strides = [1, 1, 1]} : vector<1x8x32xf32> to vector<1x8x8xf32>
    %81 = arith.truncf %80 : vector<1x8x8xf32> to vector<1x8x8xbf16>
    %82 = vector.extract_strided_slice %26 {offsets = [0, 0, 16], sizes = [1, 8, 8], strides = [1, 1, 1]} : vector<1x8x32xf32> to vector<1x8x8xf32>
    %83 = arith.truncf %82 : vector<1x8x8xf32> to vector<1x8x8xbf16>
    "tpu.trace_start"() <{level = 10 : i32, message = "bqd,bkd->bqk"}> : () -> ()
    %cst_33 = arith.constant dense<0.000000e+00> : vector<1x8x8xf32>
    %84 = tpu.matmul %79, %81, %cst_33 {dimension_numbers = #tpu.dot_dimension_numbers<[2], [2], [1], [1], [0, 0, 0, 1, 1, 1], [0], [0]>} : vector<1x8x8xbf16>, vector<1x8x8xbf16>, vector<1x8x8xf32> -> vector<1x8x8xf32>
    "tpu.trace_stop"() : () -> ()
    %85 = arith.addf %84, %33 : vector<1x8x8xf32>
    %cst_34 = arith.constant dense<0xFF800000> : vector<1x8xf32>
    %86 = vector.multi_reduction <maximumf>, %85, %cst_34 [2] : vector<1x8x8xf32> to vector<1x8xf32>
    %87 = vector.shape_cast %86 : vector<1x8xf32> to vector<1x8x1xf32>
    %88 = vector.broadcast %87 : vector<1x8x1xf32> to vector<1x8x8xf32>
    %89 = arith.subf %85, %88 : vector<1x8x8xf32>
    %90 = math.exp %89 : vector<1x8x8xf32>
    %cst_35 = arith.constant dense<0.000000e+00> : vector<1x8xf32>
    %91 = vector.multi_reduction <add>, %90, %cst_35 [2] : vector<1x8x8xf32> to vector<1x8xf32>
    %92 = vector.shape_cast %91 : vector<1x8xf32> to vector<1x8x1xf32>
    %93 = tpu.reciprocal %92 {approx = true} : vector<1x8x1xf32> -> vector<1x8x1xf32>
    %94 = vector.broadcast %93 : vector<1x8x1xf32> to vector<1x8x8xf32>
    %95 = arith.mulf %90, %94 : vector<1x8x8xf32>
    %96 = arith.truncf %95 : vector<1x8x8xf32> to vector<1x8x8xbf16>
    "tpu.trace_start"() <{level = 10 : i32, message = "bqk,bkd->bqd"}> : () -> ()
    %cst_36 = arith.constant dense<0.000000e+00> : vector<1x8x8xf32>
    %97 = tpu.matmul %96, %83, %cst_36 {dimension_numbers = #tpu.dot_dimension_numbers<[2], [1], [1], [2], [0, 0, 0, 1, 1, 2], [0], [0]>} : vector<1x8x8xbf16>, vector<1x8x8xbf16>, vector<1x8x8xf32> -> vector<1x8x8xf32>
    "tpu.trace_stop"() : () -> ()
    %98 = vector.shape_cast %97 : vector<1x8x8xf32> to vector<8x8xf32>
    %c0_37 = arith.constant 0 : index
    %c16 = arith.constant 16 : index
    %99 = vector.load %arg15[%c0_37, %c16] : memref<8x32xf32, #tpu.memory_space<vmem>>, vector<8x8xf32>
    tpu.vector_store %arg15[%c0_37, %c16], %98 {strides = array<i32>} : memref<8x32xf32, #tpu.memory_space<vmem>>, vector<8x8xf32>,
    %100 = vector.extract_strided_slice %24 {offsets = [0, 0, 24], sizes = [1, 8, 8], strides = [1, 1, 1]} : vector<1x8x32xf32> to vector<1x8x8xf32>
    %101 = arith.truncf %100 : vector<1x8x8xf32> to vector<1x8x8xbf16>
    %102 = vector.extract_strided_slice %25 {offsets = [0, 0, 24], sizes = [1, 8, 8], strides = [1, 1, 1]} : vector<1x8x32xf32> to vector<1x8x8xf32>
    %103 = arith.truncf %102 : vector<1x8x8xf32> to vector<1x8x8xbf16>
    %104 = vector.extract_strided_slice %26 {offsets = [0, 0, 24], sizes = [1, 8, 8], strides = [1, 1, 1]} : vector<1x8x32xf32> to vector<1x8x8xf32>
    %105 = arith.truncf %104 : vector<1x8x8xf32> to vector<1x8x8xbf16>
    "tpu.trace_start"() <{level = 10 : i32, message = "bqd,bkd->bqk"}> : () -> ()
    %cst_38 = arith.constant dense<0.000000e+00> : vector<1x8x8xf32>
    %106 = tpu.matmul %101, %103, %cst_38 {dimension_numbers = #tpu.dot_dimension_numbers<[2], [2], [1], [1], [0, 0, 0, 1, 1, 1], [0], [0]>} : vector<1x8x8xbf16>, vector<1x8x8xbf16>, vector<1x8x8xf32> -> vector<1x8x8xf32>
    "tpu.trace_stop"() : () -> ()
    %107 = arith.addf %106, %33 : vector<1x8x8xf32>
    %cst_39 = arith.constant dense<0xFF800000> : vector<1x8xf32>
    %108 = vector.multi_reduction <maximumf>, %107, %cst_39 [2] : vector<1x8x8xf32> to vector<1x8xf32>
    %109 = vector.shape_cast %108 : vector<1x8xf32> to vector<1x8x1xf32>
    %110 = vector.broadcast %109 : vector<1x8x1xf32> to vector<1x8x8xf32>
    %111 = arith.subf %107, %110 : vector<1x8x8xf32>
    %112 = math.exp %111 : vector<1x8x8xf32>
    %cst_40 = arith.constant dense<0.000000e+00> : vector<1x8xf32>
    %113 = vector.multi_reduction <add>, %112, %cst_40 [2] : vector<1x8x8xf32> to vector<1x8xf32>
    %114 = vector.shape_cast %113 : vector<1x8xf32> to vector<1x8x1xf32>
    %115 = tpu.reciprocal %114 {approx = true} : vector<1x8x1xf32> -> vector<1x8x1xf32>
    %116 = vector.broadcast %115 : vector<1x8x1xf32> to vector<1x8x8xf32>
    %117 = arith.mulf %112, %116 : vector<1x8x8xf32>
    %118 = arith.truncf %117 : vector<1x8x8xf32> to vector<1x8x8xbf16>
    "tpu.trace_start"() <{level = 10 : i32, message = "bqk,bkd->bqd"}> : () -> ()
    %cst_41 = arith.constant dense<0.000000e+00> : vector<1x8x8xf32>
    %119 = tpu.matmul %118, %105, %cst_41 {dimension_numbers = #tpu.dot_dimension_numbers<[2], [1], [1], [2], [0, 0, 0, 1, 1, 2], [0], [0]>} : vector<1x8x8xbf16>, vector<1x8x8xbf16>, vector<1x8x8xf32> -> vector<1x8x8xf32>
    "tpu.trace_stop"() : () -> ()
    %120 = vector.shape_cast %119 : vector<1x8x8xf32> to vector<8x8xf32>
    %c0_42 = arith.constant 0 : index
    %c24 = arith.constant 24 : index
    %121 = vector.load %arg15[%c0_42, %c24] : memref<8x32xf32, #tpu.memory_space<vmem>>, vector<8x8xf32>
    tpu.vector_store %arg15[%c0_42, %c24], %120 {strides = array<i32>} : memref<8x32xf32, #tpu.memory_space<vmem>>, vector<8x8xf32>,
    %c0_43 = arith.constant 0 : index
    %c0_44 = arith.constant 0 : index
    %122 = vector.load %arg15[%c0_43, %c0_44] : memref<8x32xf32, #tpu.memory_space<vmem>>, vector<8x32xf32>
    %123 = arith.truncf %122 : vector<8x32xf32> to vector<8x32xbf16>
    %c0_45 = arith.constant 0 : index
    %c0_46 = arith.constant 0 : index
    %124 = vector.load %arg4[%c0_45, %c0_46] : memref<32x32xbf16, #tpu.memory_space<vmem>>, vector<32x32xbf16>
    %cst_47 = arith.constant dense<0.000000e+00> : vector<8x32xf32>
    %125 = tpu.matmul %123, %124, %cst_47 {dimension_numbers = #tpu.dot_dimension_numbers<[1], [0], [0], [1], [0, 0, 1, 1], [], []>} : vector<8x32xbf16>, vector<32x32xbf16>, vector<8x32xf32> -> vector<8x32xf32>
    %c0_48 = arith.constant 0 : index
    %c0_49 = arith.constant 0 : index
    %126 = vector.load %arg5[%c0_48, %c0_49] : memref<1x32xf32, #tpu.memory_space<vmem>>, vector<1x32xf32>
    %127 = vector.broadcast %126 : vector<1x32xf32> to vector<8x32xf32>
    %128 = arith.addf %125, %127 : vector<8x32xf32>
    %129 = arith.addf %128, %1 : vector<8x32xf32>
    %c0_50 = arith.constant 0 : index
    %c0_51 = arith.constant 0 : index
    %130 = vector.load %arg6[%c0_50, %c0_51] : memref<1x32xf32, #tpu.memory_space<vmem>>, vector<1x32xf32>
    %c0_52 = arith.constant 0 : index
    %c0_53 = arith.constant 0 : index
    %131 = vector.load %arg7[%c0_52, %c0_53] : memref<1x32xf32, #tpu.memory_space<vmem>>, vector<1x32xf32>
    %cst_54 = arith.constant dense<0.000000e+00> : vector<8xf32>
    %132 = vector.multi_reduction <add>, %129, %cst_54 [1] : vector<8x32xf32> to vector<8xf32>
    %133 = vector.shape_cast %132 : vector<8xf32> to vector<8x1xf32>
    %cst_55 = arith.constant 3.200000e+01 : f32
    %134 = vector.broadcast %cst_55 : f32 to vector<8x1xf32>
    %135 = arith.divf %133, %134 : vector<8x1xf32>
    %136 = vector.broadcast %135 : vector<8x1xf32> to vector<8x32xf32>
    %137 = arith.subf %129, %136 : vector<8x32xf32>
    %138 = arith.mulf %137, %137 : vector<8x32xf32>
    %cst_56 = arith.constant dense<0.000000e+00> : vector<8xf32>
    %139 = vector.multi_reduction <add>, %138, %cst_56 [1] : vector<8x32xf32> to vector<8xf32>
    %140 = vector.shape_cast %139 : vector<8xf32> to vector<8x1xf32>
    %cst_57 = arith.constant 3.200000e+01 : f32
    %141 = vector.broadcast %cst_57 : f32 to vector<8x1xf32>
    %142 = arith.divf %140, %141 : vector<8x1xf32>
    %143 = vector.broadcast %135 : vector<8x1xf32> to vector<8x32xf32>
    %144 = arith.subf %129, %143 : vector<8x32xf32>
    %cst_58 = arith.constant 9.99999974E-6 : f32
    %145 = vector.broadcast %cst_58 : f32 to vector<8x1xf32>
    %146 = arith.addf %142, %145 : vector<8x1xf32>
    %147 = math.rsqrt %146 : vector<8x1xf32>
    %148 = vector.broadcast %147 : vector<8x1xf32> to vector<8x32xf32>
    %149 = arith.mulf %144, %148 : vector<8x32xf32>
    %150 = vector.broadcast %130 : vector<1x32xf32> to vector<8x32xf32>
    %151 = arith.mulf %149, %150 : vector<8x32xf32>
    %152 = vector.broadcast %131 : vector<1x32xf32> to vector<8x32xf32>
    %153 = arith.addf %151, %152 : vector<8x32xf32>
    %154 = arith.truncf %153 : vector<8x32xf32> to vector<8x32xbf16>
    %c0_59 = arith.constant 0 : index
    %c0_60 = arith.constant 0 : index
    %155 = vector.load %arg8[%c0_59, %c0_60] : memref<32x32xbf16, #tpu.memory_space<vmem>>, vector<32x32xbf16>
    %cst_61 = arith.constant dense<0.000000e+00> : vector<8x32xf32>
    %156 = tpu.matmul %154, %155, %cst_61 {dimension_numbers = #tpu.dot_dimension_numbers<[1], [0], [0], [1], [0, 0, 1, 1], [], []>} : vector<8x32xbf16>, vector<32x32xbf16>, vector<8x32xf32> -> vector<8x32xf32>
    %c0_62 = arith.constant 0 : index
    %c0_63 = arith.constant 0 : index
    %157 = vector.load %arg9[%c0_62, %c0_63] : memref<1x32xf32, #tpu.memory_space<vmem>>, vector<1x32xf32>
    %158 = vector.broadcast %157 : vector<1x32xf32> to vector<8x32xf32>
    %159 = arith.addf %156, %158 : vector<8x32xf32>
    %cst_64 = arith.constant 0.000000e+00 : f32
    %160 = vector.broadcast %cst_64 : f32 to vector<8x32xf32>
    %161 = arith.maximumf %159, %160 : vector<8x32xf32>
    %162 = arith.truncf %161 : vector<8x32xf32> to vector<8x32xbf16>
    %c0_65 = arith.constant 0 : index
    %c0_66 = arith.constant 0 : index
    %163 = vector.load %arg10[%c0_65, %c0_66] : memref<32x32xbf16, #tpu.memory_space<vmem>>, vector<32x32xbf16>
    %cst_67 = arith.constant dense<0.000000e+00> : vector<8x32xf32>
    %164 = tpu.matmul %162, %163, %cst_67 {dimension_numbers = #tpu.dot_dimension_numbers<[1], [0], [0], [1], [0, 0, 1, 1], [], []>} : vector<8x32xbf16>, vector<32x32xbf16>, vector<8x32xf32> -> vector<8x32xf32>
    %c0_68 = arith.constant 0 : index
    %c0_69 = arith.constant 0 : index
    %165 = vector.load %arg11[%c0_68, %c0_69] : memref<1x32xf32, #tpu.memory_space<vmem>>, vector<1x32xf32>
    %166 = vector.broadcast %165 : vector<1x32xf32> to vector<8x32xf32>
    %167 = arith.addf %164, %166 : vector<8x32xf32>
    %168 = arith.addf %167, %153 : vector<8x32xf32>
    %c0_70 = arith.constant 0 : index
    %c0_71 = arith.constant 0 : index
    %169 = vector.load %arg12[%c0_70, %c0_71] : memref<1x32xf32, #tpu.memory_space<vmem>>, vector<1x32xf32>
    %c0_72 = arith.constant 0 : index
    %c0_73 = arith.constant 0 : index
    %170 = vector.load %arg13[%c0_72, %c0_73] : memref<1x32xf32, #tpu.memory_space<vmem>>, vector<1x32xf32>
    %cst_74 = arith.constant dense<0.000000e+00> : vector<8xf32>
    %171 = vector.multi_reduction <add>, %168, %cst_74 [1] : vector<8x32xf32> to vector<8xf32>
    %172 = vector.shape_cast %171 : vector<8xf32> to vector<8x1xf32>
    %cst_75 = arith.constant 3.200000e+01 : f32
    %173 = vector.broadcast %cst_75 : f32 to vector<8x1xf32>
    %174 = arith.divf %172, %173 : vector<8x1xf32>
    %175 = vector.broadcast %174 : vector<8x1xf32> to vector<8x32xf32>
    %176 = arith.subf %168, %175 : vector<8x32xf32>
    %177 = arith.mulf %176, %176 : vector<8x32xf32>
    %cst_76 = arith.constant dense<0.000000e+00> : vector<8xf32>
    %178 = vector.multi_reduction <add>, %177, %cst_76 [1] : vector<8x32xf32> to vector<8xf32>
    %179 = vector.shape_cast %178 : vector<8xf32> to vector<8x1xf32>
    %cst_77 = arith.constant 3.200000e+01 : f32
    %180 = vector.broadcast %cst_77 : f32 to vector<8x1xf32>
    %181 = arith.divf %179, %180 : vector<8x1xf32>
    %182 = vector.broadcast %174 : vector<8x1xf32> to vector<8x32xf32>
    %183 = arith.subf %168, %182 : vector<8x32xf32>
    %cst_78 = arith.constant 9.99999974E-6 : f32
    %184 = vector.broadcast %cst_78 : f32 to vector<8x1xf32>
    %185 = arith.addf %181, %184 : vector<8x1xf32>
    %186 = math.rsqrt %185 : vector<8x1xf32>
    %187 = vector.broadcast %186 : vector<8x1xf32> to vector<8x32xf32>
    %188 = arith.mulf %183, %187 : vector<8x32xf32>
    %189 = vector.broadcast %169 : vector<1x32xf32> to vector<8x32xf32>
    %190 = arith.mulf %188, %189 : vector<8x32xf32>
    %191 = vector.broadcast %170 : vector<1x32xf32> to vector<8x32xf32>
    %192 = arith.addf %190, %191 : vector<8x32xf32>
    %193 = vector.shape_cast %192 : vector<8x32xf32> to vector<1x8x32xf32>
    %c0_79 = arith.constant 0 : index
    %c0_80 = arith.constant 0 : index
    %c0_81 = arith.constant 0 : index
    %194 = vector.load %arg14[%c0_79, %c0_80, %c0_81] : memref<1x8x32xf32, #tpu.memory_space<vmem>>, vector<1x8x32xf32>
    tpu.vector_store %arg14[%c0_79, %c0_80, %c0_81], %193 {strides = array<i32>} : memref<1x8x32xf32, #tpu.memory_space<vmem>>, vector<1x8x32xf32>,
    return
  }
  func.func @transform_0(%arg0: i32) -> (i32, i32, i32) {
    %c0_i32 = arith.constant 0 : i32
    %c0_i32_0 = arith.constant 0 : i32
    %c0_i32_1 = arith.constant 0 : i32
    return %arg0, %c0_i32, %c0_i32_0 : i32, i32, i32
  }
  func.func @transform_1(%arg0: i32) -> (i32, i32, i32) {
    %c0_i32 = arith.constant 0 : i32
    %c0_i32_0 = arith.constant 0 : i32
    %c0_i32_1 = arith.constant 0 : i32
    %c0_i32_2 = arith.constant 0 : i32
    return %c0_i32, %c0_i32_0, %c0_i32_1 : i32, i32, i32
  }
  func.func @transform_2(%arg0: i32) -> (i32, i32, i32) {
    %c0_i32 = arith.constant 0 : i32
    %c0_i32_0 = arith.constant 0 : i32
    %c0_i32_1 = arith.constant 0 : i32
    %c0_i32_2 = arith.constant 0 : i32
    return %c0_i32, %c0_i32_0, %c0_i32_1 : i32, i32, i32
  }
  func.func @transform_3(%arg0: i32) -> (i32, i32) {
    %c0_i32 = arith.constant 0 : i32
    %c0_i32_0 = arith.constant 0 : i32
    %c0_i32_1 = arith.constant 0 : i32
    return %c0_i32, %c0_i32_0 : i32, i32
  }
  func.func @transform_4(%arg0: i32) -> (i32, i32) {
    %c0_i32 = arith.constant 0 : i32
    %c0_i32_0 = arith.constant 0 : i32
    %c0_i32_1 = arith.constant 0 : i32
    return %c0_i32, %c0_i32_0 : i32, i32
  }
  func.func @transform_5(%arg0: i32) -> (i32, i32) {
    %c0_i32 = arith.constant 0 : i32
    %c0_i32_0 = arith.constant 0 : i32
    %c0_i32_1 = arith.constant 0 : i32
    return %c0_i32, %c0_i32_0 : i32, i32
  }
  func.func @transform_6(%arg0: i32) -> (i32, i32) {
    %c0_i32 = arith.constant 0 : i32
    %c0_i32_0 = arith.constant 0 : i32
    %c0_i32_1 = arith.constant 0 : i32
    return %c0_i32, %c0_i32_0 : i32, i32
  }
  func.func @transform_7(%arg0: i32) -> (i32, i32) {
    %c0_i32 = arith.constant 0 : i32
    %c0_i32_0 = arith.constant 0 : i32
    %c0_i32_1 = arith.constant 0 : i32
    return %c0_i32, %c0_i32_0 : i32, i32
  }
  func.func @transform_8(%arg0: i32) -> (i32, i32) {
    %c0_i32 = arith.constant 0 : i32
    %c0_i32_0 = arith.constant 0 : i32
    %c0_i32_1 = arith.constant 0 : i32
    return %c0_i32, %c0_i32_0 : i32, i32
  }
  func.func @transform_9(%arg0: i32) -> (i32, i32) {
    %c0_i32 = arith.constant 0 : i32
    %c0_i32_0 = arith.constant 0 : i32
    %c0_i32_1 = arith.constant 0 : i32
    return %c0_i32, %c0_i32_0 : i32, i32
  }
  func.func @transform_10(%arg0: i32) -> (i32, i32) {
    %c0_i32 = arith.constant 0 : i32
    %c0_i32_0 = arith.constant 0 : i32
    %c0_i32_1 = arith.constant 0 : i32
    return %c0_i32, %c0_i32_0 : i32, i32
  }
  func.func @transform_11(%arg0: i32) -> (i32, i32) {
    %c0_i32 = arith.constant 0 : i32
    %c0_i32_0 = arith.constant 0 : i32
    %c0_i32_1 = arith.constant 0 : i32
    return %c0_i32, %c0_i32_0 : i32, i32
  }
  func.func @transform_12(%arg0: i32) -> (i32, i32) {
    %c0_i32 = arith.constant 0 : i32
    %c0_i32_0 = arith.constant 0 : i32
    %c0_i32_1 = arith.constant 0 : i32
    return %c0_i32, %c0_i32_0 : i32, i32
  }
  func.func @transform_13(%arg0: i32) -> (i32, i32, i32) {
    %c0_i32 = arith.constant 0 : i32
    %c0_i32_0 = arith.constant 0 : i32
    %c0_i32_1 = arith.constant 0 : i32
    return %arg0, %c0_i32, %c0_i32_0 : i32, i32, i32
  }
}

</mosaic_0001>

<llo_original>
// kernel: tpu_custom_call.1
$region0: #{tpu_custom_call.1}
  #allocation0 [shape = 'u32[]', space=smem, size = 0x4, offset = 0x4, fixed_abs, tag = 'smem constant byte address 0x4 - core index']
  #allocation1 [shape = 'u32[144,128]{1,0:T(1,128)}', space=vmem, size = 0x12000, scoped, tag = 'internal scratch']
  #allocation2 [shape = 'f32[8,32]{1,0:T(8,128)}', space=vmem, size = 0x1000, scoped, tag = 'scratch operand']
  %s0 = inlined_call_operand.hbm [shape: f32[2,8,32], index: 0, kind: input, shape index: {}]
  %s1 = inlined_call_operand.hbm [shape: bf16[3,32,32], index: 1, kind: input, shape index: {}]
  %s2 = inlined_call_operand.hbm [shape: f32[3,1,32], index: 2, kind: input, shape index: {}]
  %s3 = inlined_call_operand.hbm [shape: bf16[32,32], index: 3, kind: input, shape index: {}]
  %s4 = inlined_call_operand.hbm [shape: f32[1,32], index: 4, kind: input, shape index: {}]
  %s5 = inlined_call_operand.hbm [shape: f32[1,32], index: 5, kind: input, shape index: {}]
  %s6 = inlined_call_operand.hbm [shape: f32[1,32], index: 6, kind: input, shape index: {}]
  %s7 = inlined_call_operand.hbm [shape: bf16[32,32], index: 7, kind: input, shape index: {}]
  %s8 = inlined_call_operand.hbm [shape: f32[1,32], index: 8, kind: input, shape index: {}]
  %s9 = inlined_call_operand.hbm [shape: bf16[32,32], index: 9, kind: input, shape index: {}]
  %s10 = inlined_call_operand.hbm [shape: f32[1,32], index: 10, kind: input, shape index: {}]
  %s11 = inlined_call_operand.hbm [shape: f32[1,32], index: 11, kind: input, shape index: {}]
  %s12 = inlined_call_operand.hbm [shape: f32[1,32], index: 12, kind: input, shape index: {}]
  %s13 = inlined_call_operand.hbm [shape: f32[2,8,32], index: 13, kind: output, shape index: {}]
  %s14 = sld [smem:[#allocation0]]
  $region137: #{tpu_custom_call.1} parent=0
    _
  %s16 = ssub.s32 1, %s14
  %s17 = scalar_select 0, %s16, %s14
  $region1: #{tpu_custom_call.1} parent=0
    #allocation3 [shape = 'u8[8192]{0}', space=vmem, size = 0x2000, scoped, tag = 'input window, operand 0']
    #allocation4 [shape = 's32[2]{0}', space=sflag, size = 0x8, scoped, tag = 'scoped memory for tpu_custom_call.1']
    #allocation5 [shape = 's32[2]{0}', space=sflag, size = 0x8, scoped, tag = 'scoped memory for tpu_custom_call.1']
    #allocation6 [shape = 'u8[24576]{0}', space=vmem, size = 0x6000, scoped, tag = 'input window, operand 1, single buffered']
    #allocation7 [shape = 's32[1]{0}', space=sflag, size = 0x4, scoped, tag = 'scoped memory for tpu_custom_call.1']
    #allocation8 [shape = 'u8[1536]{0}', space=vmem, size = 0x800, scoped, tag = 'input window, operand 2, single buffered']
    #allocation9 [shape = 'u8[8192]{0}', space=vmem, size = 0x2000, scoped, tag = 'input window, operand 3, single buffered']
    #allocation10 [shape = 's32[1]{0}', space=sflag, size = 0x4, scoped, tag = 'scoped memory for tpu_custom_call.1']
    #allocation11 [shape = 'u8[512]{0}', space=vmem, size = 0x400, scoped, tag = 'input window, operand 4, single buffered']
    #allocation12 [shape = 'u8[512]{0}', space=vmem, size = 0x400, scoped, tag = 'input window, operand 5, single buffered']
    #allocation13 [shape = 's32[1]{0}', space=sflag, size = 0x4, scoped, tag = 'scoped memory for tpu_custom_call.1']
    #allocation14 [shape = 'u8[512]{0}', space=vmem, size = 0x400, scoped, tag = 'input window, operand 6, single buffered']
    #allocation15 [shape = 'u8[8192]{0}', space=vmem, size = 0x2000, scoped, tag = 'input window, operand 7, single buffered']
    #allocation16 [shape = 's32[1]{0}', space=sflag, size = 0x4, scoped, tag = 'scoped memory for tpu_custom_call.1']
    #allocation17 [shape = 'u8[512]{0}', space=vmem, size = 0x400, scoped, tag = 'input window, operand 8, single buffered']
    #allocation18 [shape = 'u8[8192]{0}', space=vmem, size = 0x2000, scoped, tag = 'input window, operand 9, single buffered']
    #allocation19 [shape = 's32[1]{0}', space=sflag, size = 0x4, scoped, tag = 'scoped memory for tpu_custom_call.1']
    #allocation20 [shape = 'u8[512]{0}', space=vmem, size = 0x400, scoped, tag = 'input window, operand 10, single buffered']
    #allocation21 [shape = 'u8[512]{0}', space=vmem, size = 0x400, scoped, tag = 'input window, operand 11, single buffered']
    #allocation22 [shape = 's32[1]{0}', space=sflag, size = 0x4, scoped, tag = 'scoped memory for tpu_custom_call.1']
    #allocation23 [shape = 'u8[512]{0}', space=vmem, size = 0x400, scoped, tag = 'input window, operand 12, single buffered']
    #allocation24 [shape = 'u8[8192]{0}', space=vmem, size = 0x2000, scoped, tag = 'output window, operand 0']
    %18 = vsyncpa [#allocation4], 0
    %s19 = scalar_lea.sflag [#allocation4], 1
    %20 = vsyncpa %s19, 0
    %21 = vsyncpa [#allocation7], 0
    %22 = vsyncpa [#allocation10], 0
    %23 = vsyncpa [#allocation13], 0
    %24 = vsyncpa [#allocation16], 0
    %25 = vsyncpa [#allocation19], 0
    %26 = vsyncpa [#allocation22], 0
    %27 = vsyncpa [#allocation5], 0
    %s28 = scalar_lea.sflag [#allocation5], 1
    %29 = vsyncpa %s28, 0
    loop: start=0, step=1, limit=4
    $region2: #{tpu_custom_call.1} parent=1 // loop_pre_header
      _
    $region3: #{tpu_custom_call.1} parent=1 // loop_header
      %s31 = sphi 0, %s35
      %p32 = scmp.ge.s32.totalorder %s31, 4
      %s41 = sphi 0, %s43
      %s44 = sphi 0, %s41
      %s45 = sphi 0, %s44
      %s61 = sphi 0, %s45
      %s65 = sphi 0, %s65
      %s67 = sphi 0, %s65
      %s68 = sphi 0, %s67
      %s82 = sphi 0, %s68
      %s86 = sphi 0, %s86
      %s88 = sphi 0, %s86
      %s89 = sphi 0, %s88
      %s103 = sphi 0, %s89
      %s107 = sphi 0, %s107
      %s109 = sphi 0, %s107
      %s110 = sphi 0, %s109
      %s124 = sphi 0, %s110
      %s128 = sphi 0, %s128
      %s130 = sphi 0, %s128
      %s131 = sphi 0, %s130
      %s145 = sphi 0, %s131
      %s149 = sphi 0, %s149
      %s151 = sphi 0, %s149
      %s152 = sphi 0, %s151
      %s166 = sphi 0, %s152
      %s170 = sphi 0, %s170
      %s172 = sphi 0, %s170
      %s173 = sphi 0, %s172
      %s187 = sphi 0, %s173
      %s191 = sphi 0, %s191
      %s193 = sphi 0, %s191
      %s194 = sphi 0, %s193
      %s208 = sphi 0, %s194
      %s212 = sphi 0, %s212
      %s214 = sphi 0, %s212
      %s215 = sphi 0, %s214
      %s229 = sphi 0, %s215
      %s233 = sphi 0, %s233
      %s235 = sphi 0, %s233
      %s236 = sphi 0, %s235
      %s250 = sphi 0, %s236
      %s254 = sphi 0, %s254
      %s256 = sphi 0, %s254
      %s257 = sphi 0, %s256
      %s271 = sphi 0, %s257
      %s275 = sphi 0, %s275
      %s277 = sphi 0, %s275
      %s278 = sphi 0, %s277
      %s292 = sphi 0, %s278
      %s296 = sphi 0, %s296
      %s298 = sphi 0, %s296
      %s299 = sphi 0, %s298
      %s313 = sphi 0, %s299
      %s319 = sphi 0, %s321
      %s322 = sphi 0, %s319
      %s323 = sphi 0, %s322
      %s339 = sphi 0, %s323
    $region4: #{tpu_custom_call.1} parent=1 // loop_header_branch
      %34 = sbr.rel (%p32) target = $region8
    $region5: #{tpu_custom_call.1} parent=1 // loop_body
      %s36 = ssub.s32 %s31, 1
      %s37 = ssub.s32 %s31, 2
      %s38 = sadd.s32 %s31, 1
      %s39 = ssub.s32 %s31, %s38
      %p40 = scmp.eq.s32.totalorder %s39, 0
      %s42 = sadd.s32 %s41, 1
      %s43 = scalar_select %p40, %s41, %s42
      %p46 = pneg %p40
      %p47 = scmp.eq.s32.totalorder %s31, 1
      %p48 = por %p46, %p47
      %p49 = scmp.ne.s32.totalorder %s41, %s44
      %p50 = scmp.eq.s32.totalorder %s31, 0
      %p51 = por %p49, %p50
      %p52 = scmp.ne.s32.totalorder %s41, %s44
      %p53 = scmp.eq.s32.totalorder %s36, 1
      %p54 = por %p52, %p53
      %p55 = scmp.ne.s32.totalorder %s44, %s45
      %p56 = scmp.eq.s32.totalorder %s36, 0
      %p57 = por %p55, %p56
      %p58 = scmp.ne.s32.totalorder %s44, %s45
      %p59 = scmp.eq.s32.totalorder %s37, 1
      %p60 = por %p58, %p59
      %p62 = scmp.ne.s32.totalorder %s45, %s61
      %p63 = scmp.eq.s32.totalorder %s37, 0
      %p64 = por %p62, %p63
      %s66 = sadd.s32 %s65, 1
      %p69 = scmp.eq.s32.totalorder %s31, 1
      %p70 = scmp.ne.s32.totalorder %s65, %s67
      %p71 = scmp.eq.s32.totalorder %s31, 0
      %p72 = por %p70, %p71
      %p73 = scmp.ne.s32.totalorder %s65, %s67
      %p74 = scmp.eq.s32.totalorder %s36, 1
      %p75 = por %p73, %p74
      %p76 = scmp.ne.s32.totalorder %s67, %s68
      %p77 = scmp.eq.s32.totalorder %s36, 0
      %p78 = por %p76, %p77
      %p79 = scmp.ne.s32.totalorder %s67, %s68
      %p80 = scmp.eq.s32.totalorder %s37, 1
      %p81 = por %p79, %p80
      %p83 = scmp.ne.s32.totalorder %s68, %s82
      %p84 = scmp.eq.s32.totalorder %s37, 0
      %p85 = por %p83, %p84
      %s87 = sadd.s32 %s86, 1
      %p90 = scmp.eq.s32.totalorder %s31, 1
      %p91 = scmp.ne.s32.totalorder %s86, %s88
      %p92 = scmp.eq.s32.totalorder %s31, 0
      %p93 = por %p91, %p92
      %p94 = scmp.ne.s32.totalorder %s86, %s88
      %p95 = scmp.eq.s32.totalorder %s36, 1
      %p96 = por %p94, %p95
      %p97 = scmp.ne.s32.totalorder %s88, %s89
      %p98 = scmp.eq.s32.totalorder %s36, 0
      %p99 = por %p97, %p98
      %p100 = scmp.ne.s32.totalorder %s88, %s89
      %p101 = scmp.eq.s32.totalorder %s37, 1
      %p102 = por %p100, %p101
      %p104 = scmp.ne.s32.totalorder %s89, %s103
      %p105 = scmp.eq.s32.totalorder %s37, 0
      %p106 = por %p104, %p105
      %s108 = sadd.s32 %s107, 1
      %p111 = scmp.eq.s32.totalorder %s31, 1
      %p112 = scmp.ne.s32.totalorder %s107, %s109
      %p113 = scmp.eq.s32.totalorder %s31, 0
      %p114 = por %p112, %p113
      %p115 = scmp.ne.s32.totalorder %s107, %s109
      %p116 = scmp.eq.s32.totalorder %s36, 1
      %p117 = por %p115, %p116
      %p118 = scmp.ne.s32.totalorder %s109, %s110
      %p119 = scmp.eq.s32.totalorder %s36, 0
      %p120 = por %p118, %p119
      %p121 = scmp.ne.s32.totalorder %s109, %s110
      %p122 = scmp.eq.s32.totalorder %s37, 1
      %p123 = por %p121, %p122
      %p125 = scmp.ne.s32.totalorder %s110, %s124
      %p126 = scmp.eq.s32.totalorder %s37, 0
      %p127 = por %p125, %p126
      %s129 = sadd.s32 %s128, 1
      %p132 = scmp.eq.s32.totalorder %s31, 1
      %p133 = scmp.ne.s32.totalorder %s128, %s130
      %p134 = scmp.eq.s32.totalorder %s31, 0
      %p135 = por %p133, %p134
      %p136 = scmp.ne.s32.totalorder %s128, %s130
      %p137 = scmp.eq.s32.totalorder %s36, 1
      %p138 = por %p136, %p137
      %p139 = scmp.ne.s32.totalorder %s130, %s131
      %p140 = scmp.eq.s32.totalorder %s36, 0
      %p141 = por %p139, %p140
      %p142 = scmp.ne.s32.totalorder %s130, %s131
      %p143 = scmp.eq.s32.totalorder %s37, 1
      %p144 = por %p142, %p143
      %p146 = scmp.ne.s32.totalorder %s131, %s145
      %p147 = scmp.eq.s32.totalorder %s37, 0
      %p148 = por %p146, %p147
      %s150 = sadd.s32 %s149, 1
      %p153 = scmp.eq.s32.totalorder %s31, 1
      %p154 = scmp.ne.s32.totalorder %s149, %s151
      %p155 = scmp.eq.s32.totalorder %s31, 0
      %p156 = por %p154, %p155
      %p157 = scmp.ne.s32.totalorder %s149, %s151
      %p158 = scmp.eq.s32.totalorder %s36, 1
      %p159 = por %p157, %p158
      %p160 = scmp.ne.s32.totalorder %s151, %s152
      %p161 = scmp.eq.s32.totalorder %s36, 0
      %p162 = por %p160, %p161
      %p163 = scmp.ne.s32.totalorder %s151, %s152
      %p164 = scmp.eq.s32.totalorder %s37, 1
      %p165 = por %p163, %p164
      %p167 = scmp.ne.s32.totalorder %s152, %s166
      %p168 = scmp.eq.s32.totalorder %s37, 0
      %p169 = por %p167, %p168
      %s171 = sadd.s32 %s170, 1
      %p174 = scmp.eq.s32.totalorder %s31, 1
      %p175 = scmp.ne.s32.totalorder %s170, %s172
      %p176 = scmp.eq.s32.totalorder %s31, 0
      %p177 = por %p175, %p176
      %p178 = scmp.ne.s32.totalorder %s170, %s172
      %p179 = scmp.eq.s32.totalorder %s36, 1
      %p180 = por %p178, %p179
      %p181 = scmp.ne.s32.totalorder %s172, %s173
      %p182 = scmp.eq.s32.totalorder %s36, 0
      %p183 = por %p181, %p182
      %p184 = scmp.ne.s32.totalorder %s172, %s173
      %p185 = scmp.eq.s32.totalorder %s37, 1
      %p186 = por %p184, %p185
      %p188 = scmp.ne.s32.totalorder %s173, %s187
      %p189 = scmp.eq.s32.totalorder %s37, 0
      %p190 = por %p188, %p189
      %s192 = sadd.s32 %s191, 1
      %p195 = scmp.eq.s32.totalorder %s31, 1
      %p196 = scmp.ne.s32.totalorder %s191, %s193
      %p197 = scmp.eq.s32.totalorder %s31, 0
      %p198 = por %p196, %p197
      %p199 = scmp.ne.s32.totalorder %s191, %s193
      %p200 = scmp.eq.s32.totalorder %s36, 1
      %p201 = por %p199, %p200
      %p202 = scmp.ne.s32.totalorder %s193, %s194
      %p203 = scmp.eq.s32.totalorder %s36, 0
      %p204 = por %p202, %p203
      %p205 = scmp.ne.s32.totalorder %s193, %s194
      %p206 = scmp.eq.s32.totalorder %s37, 1
      %p207 = por %p205, %p206
      %p209 = scmp.ne.s32.totalorder %s194, %s208
      %p210 = scmp.eq.s32.totalorder %s37, 0
      %p211 = por %p209, %p210
      %s213 = sadd.s32 %s212, 1
      %p216 = scmp.eq.s32.totalorder %s31, 1
      %p217 = scmp.ne.s32.totalorder %s212, %s214
      %p218 = scmp.eq.s32.totalorder %s31, 0
      %p219 = por %p217, %p218
      %p220 = scmp.ne.s32.totalorder %s212, %s214
      %p221 = scmp.eq.s32.totalorder %s36, 1
      %p222 = por %p220, %p221
      %p223 = scmp.ne.s32.totalorder %s214, %s215
      %p224 = scmp.eq.s32.totalorder %s36, 0
      %p225 = por %p223, %p224
      %p226 = scmp.ne.s32.totalorder %s214, %s215
      %p227 = scmp.eq.s32.totalorder %s37, 1
      %p228 = por %p226, %p227
      %p230 = scmp.ne.s32.totalorder %s215, %s229
      %p231 = scmp.eq.s32.totalorder %s37, 0
      %p232 = por %p230, %p231
      %s234 = sadd.s32 %s233, 1
      %p237 = scmp.eq.s32.totalorder %s31, 1
      %p238 = scmp.ne.s32.totalorder %s233, %s235
      %p239 = scmp.eq.s32.totalorder %s31, 0
      %p240 = por %p238, %p239
      %p241 = scmp.ne.s32.totalorder %s233, %s235
      %p242 = scmp.eq.s32.totalorder %s36, 1
      %p243 = por %p241, %p242
      %p244 = scmp.ne.s32.totalorder %s235, %s236
      %p245 = scmp.eq.s32.totalorder %s36, 0
      %p246 = por %p244, %p245
      %p247 = scmp.ne.s32.totalorder %s235, %s236
      %p248 = scmp.eq.s32.totalorder %s37, 1
      %p249 = por %p247, %p248
      %p251 = scmp.ne.s32.totalorder %s236, %s250
      %p252 = scmp.eq.s32.totalorder %s37, 0
      %p253 = por %p251, %p252
      %s255 = sadd.s32 %s254, 1
      %p258 = scmp.eq.s32.totalorder %s31, 1
      %p259 = scmp.ne.s32.totalorder %s254, %s256
      %p260 = scmp.eq.s32.totalorder %s31, 0
      %p261 = por %p259, %p260
      %p262 = scmp.ne.s32.totalorder %s254, %s256
      %p263 = scmp.eq.s32.totalorder %s36, 1
      %p264 = por %p262, %p263
      %p265 = scmp.ne.s32.totalorder %s256, %s257
      %p266 = scmp.eq.s32.totalorder %s36, 0
      %p267 = por %p265, %p266
      %p268 = scmp.ne.s32.totalorder %s256, %s257
      %p269 = scmp.eq.s32.totalorder %s37, 1
      %p270 = por %p268, %p269
      %p272 = scmp.ne.s32.totalorder %s257, %s271
      %p273 = scmp.eq.s32.totalorder %s37, 0
      %p274 = por %p272, %p273
      %s276 = sadd.s32 %s275, 1
      %p279 = scmp.eq.s32.totalorder %s31, 1
      %p280 = scmp.ne.s32.totalorder %s275, %s277
      %p281 = scmp.eq.s32.totalorder %s31, 0
      %p282 = por %p280, %p281
      %p283 = scmp.ne.s32.totalorder %s275, %s277
      %p284 = scmp.eq.s32.totalorder %s36, 1
      %p285 = por %p283, %p284
      %p286 = scmp.ne.s32.totalorder %s277, %s278
      %p287 = scmp.eq.s32.totalorder %s36, 0
      %p288 = por %p286, %p287
      %p289 = scmp.ne.s32.totalorder %s277, %s278
      %p290 = scmp.eq.s32.totalorder %s37, 1
      %p291 = por %p289, %p290
      %p293 = scmp.ne.s32.totalorder %s278, %s292
      %p294 = scmp.eq.s32.totalorder %s37, 0
      %p295 = por %p293, %p294
      %s297 = sadd.s32 %s296, 1
      %p300 = scmp.eq.s32.totalorder %s31, 1
      %p301 = scmp.ne.s32.totalorder %s296, %s298
      %p302 = scmp.eq.s32.totalorder %s31, 0
      %p303 = por %p301, %p302
      %p304 = scmp.ne.s32.totalorder %s296, %s298
      %p305 = scmp.eq.s32.totalorder %s36, 1
      %p306 = por %p304, %p305
      %p307 = scmp.ne.s32.totalorder %s298, %s299
      %p308 = scmp.eq.s32.totalorder %s36, 0
      %p309 = por %p307, %p308
      %p310 = scmp.ne.s32.totalorder %s298, %s299
      %p311 = scmp.eq.s32.totalorder %s37, 1
      %p312 = por %p310, %p311
      %p314 = scmp.ne.s32.totalorder %s299, %s313
      %p315 = scmp.eq.s32.totalorder %s37, 0
      %p316 = por %p314, %p315
      %s317 = ssub.s32 %s31, %s38
      %p318 = scmp.eq.s32.totalorder %s317, 0
      %s320 = sadd.s32 %s319, 1
      %s321 = scalar_select %p318, %s319, %s320
      %p324 = pneg %p318
      %p325 = scmp.eq.s32.totalorder %s31, 1
      %p326 = por %p324, %p325
      %p327 = scmp.ne.s32.totalorder %s319, %s322
      %p328 = scmp.eq.s32.totalorder %s31, 0
      %p329 = por %p327, %p328
      %p330 = scmp.ne.s32.totalorder %s319, %s322
      %p331 = scmp.eq.s32.totalorder %s36, 1
      %p332 = por %p330, %p331
      %p333 = scmp.ne.s32.totalorder %s322, %s323
      %p334 = scmp.eq.s32.totalorder %s36, 0
      %p335 = por %p333, %p334
      %p336 = scmp.ne.s32.totalorder %s322, %s323
      %p337 = scmp.eq.s32.totalorder %s37, 1
      %p338 = por %p336, %p337
      %p340 = scmp.ne.s32.totalorder %s323, %s339
      %p341 = scmp.eq.s32.totalorder %s37, 0
      %p342 = por %p340, %p341
      %p343 = scmp.le.s32.totalorder 1, %s31
      %p344 = scmp.lt.s32.totalorder %s31, 3
      %p345 = pnand %p343, %p344
      %p346 = pneg %p345
      // Predicated region
      $region9: #{tpu_custom_call.1} parent=5 // pred_check
        _
      $region10: #{tpu_custom_call.1} parent=5 // pred_check_branch
        %348 = sbr.rel (%p345) target = $region12
      $region11: #{tpu_custom_call.1} parent=5 // pred_region
        %s349 = ssub.s32 %s31, 1
        // Predicated region
        $region13: #{tpu_custom_call.1} parent=11 // pred_check
          %p350 = pneg %p78
        $region14: #{tpu_custom_call.1} parent=11 // pred_check_branch
          %352 = sbr.rel (%p350) target = $region16
        $region15: #{tpu_custom_call.1} parent=11 // pred_region
          %s354 = ssub.s32 768, 768
          %355 = vsyncadd [#allocation7], %s354
          %s356 = sshll.u32 [#allocation6], 4
          %s357 = int_to_ptr.vmem [resolvable:$true] %s356
          %362 = dma.hbm_to_vmem [thread:$0]  %s1, 768, %s357, [#allocation7], 64, 64, 4
        $region16: #{tpu_custom_call.1} parent=11 // pred_fallthru
          _
        // Predicated region
        $region17: #{tpu_custom_call.1} parent=11 // pred_check
          %p363 = pneg %p99
        $region18: #{tpu_custom_call.1} parent=11 // pred_check_branch
          %365 = sbr.rel (%p363) target = $region20
        $region19: #{tpu_custom_call.1} parent=11 // pred_region
          %s367 = ssub.s32 48, 48
          %368 = vsyncadd [#allocation7], %s367
          %s369 = sshll.u32 [#allocation8], 4
          %s370 = int_to_ptr.vmem [resolvable:$true] %s369
          %375 = dma.hbm_to_vmem [thread:$0]  %s2, 48, %s370, [#allocation7], 16, 16, 1
        $region20: #{tpu_custom_call.1} parent=11 // pred_fallthru
          _
        // Predicated region
        $region21: #{tpu_custom_call.1} parent=11 // pred_check
          %p376 = pneg %p120
        $region22: #{tpu_custom_call.1} parent=11 // pred_check_branch
          %378 = sbr.rel (%p376) target = $region24
        $region23: #{tpu_custom_call.1} parent=11 // pred_region
          %s380 = ssub.s32 256, 256
          %381 = vsyncadd [#allocation10], %s380
          %s382 = sshll.u32 [#allocation9], 4
          %s383 = int_to_ptr.vmem [resolvable:$true] %s382
          %388 = dma.hbm_to_vmem [thread:$0]  %s3, 256, %s383, [#allocation10], 64, 64, 4
        $region24: #{tpu_custom_call.1} parent=11 // pred_fallthru
          _
        // Predicated region
        $region25: #{tpu_custom_call.1} parent=11 // pred_check
          %p389 = pneg %p141
        $region26: #{tpu_custom_call.1} parent=11 // pred_check_branch
          %391 = sbr.rel (%p389) target = $region28
        $region27: #{tpu_custom_call.1} parent=11 // pred_region
          %s393 = ssub.s32 16, 16
          %394 = vsyncadd [#allocation10], %s393
          %s396 = sshll.u32 [#allocation11], 4
          %s397 = int_to_ptr.vmem [resolvable:$true] %s396
          %399 = dma.hbm_to_vmem [thread:$0]  %s4, 16, %s397, [#allocation10]
        $region28: #{tpu_custom_call.1} parent=11 // pred_fallthru
          _
        // Predicated region
        $region29: #{tpu_custom_call.1} parent=11 // pred_check
          %p400 = pneg %p162
        $region30: #{tpu_custom_call.1} parent=11 // pred_check_branch
          %402 = sbr.rel (%p400) target = $region32
        $region31: #{tpu_custom_call.1} parent=11 // pred_region
          %s404 = ssub.s32 16, 16
          %405 = vsyncadd [#allocation13], %s404
          %s407 = sshll.u32 [#allocation12], 4
          %s408 = int_to_ptr.vmem [resolvable:$true] %s407
          %410 = dma.hbm_to_vmem [thread:$0]  %s5, 16, %s408, [#allocation13]
        $region32: #{tpu_custom_call.1} parent=11 // pred_fallthru
          _
        // Predicated region
        $region33: #{tpu_custom_call.1} parent=11 // pred_check
          %p411 = pneg %p183
        $region34: #{tpu_custom_call.1} parent=11 // pred_check_branch
          %413 = sbr.rel (%p411) target = $region36
        $region35: #{tpu_custom_call.1} parent=11 // pred_region
          %s415 = ssub.s32 16, 16
          %416 = vsyncadd [#allocation13], %s415
          %s418 = sshll.u32 [#allocation14], 4
          %s419 = int_to_ptr.vmem [resolvable:$true] %s418
          %421 = dma.hbm_to_vmem [thread:$0]  %s6, 16, %s419, [#allocation13]
        $region36: #{tpu_custom_call.1} parent=11 // pred_fallthru
          _
        // Predicated region
        $region37: #{tpu_custom_call.1} parent=11 // pred_check
          %p422 = pneg %p204
        $region38: #{tpu_custom_call.1} parent=11 // pred_check_branch
          %424 = sbr.rel (%p422) target = $region40
        $region39: #{tpu_custom_call.1} parent=11 // pred_region
          %s426 = ssub.s32 256, 256
          %427 = vsyncadd [#allocation16], %s426
          %s428 = sshll.u32 [#allocation15], 4
          %s429 = int_to_ptr.vmem [resolvable:$true] %s428
          %434 = dma.hbm_to_vmem [thread:$0]  %s7, 256, %s429, [#allocation16], 64, 64, 4
        $region40: #{tpu_custom_call.1} parent=11 // pred_fallthru
          _
        // Predicated region
        $region41: #{tpu_custom_call.1} parent=11 // pred_check
          %p435 = pneg %p225
        $region42: #{tpu_custom_call.1} parent=11 // pred_check_branch
          %437 = sbr.rel (%p435) target = $region44
        $region43: #{tpu_custom_call.1} parent=11 // pred_region
          %s439 = ssub.s32 16, 16
          %440 = vsyncadd [#allocation16], %s439
          %s442 = sshll.u32 [#allocation17], 4
          %s443 = int_to_ptr.vmem [resolvable:$true] %s442
          %445 = dma.hbm_to_vmem [thread:$0]  %s8, 16, %s443, [#allocation16]
        $region44: #{tpu_custom_call.1} parent=11 // pred_fallthru
          _
        // Predicated region
        $region45: #{tpu_custom_call.1} parent=11 // pred_check
          %p446 = pneg %p246
        $region46: #{tpu_custom_call.1} parent=11 // pred_check_branch
          %448 = sbr.rel (%p446) target = $region48
        $region47: #{tpu_custom_call.1} parent=11 // pred_region
          %s450 = ssub.s32 256, 256
          %451 = vsyncadd [#allocation19], %s450
          %s452 = sshll.u32 [#allocation18], 4
          %s453 = int_to_ptr.vmem [resolvable:$true] %s452
          %458 = dma.hbm_to_vmem [thread:$0]  %s9, 256, %s453, [#allocation19], 64, 64, 4
        $region48: #{tpu_custom_call.1} parent=11 // pred_fallthru
          _
        // Predicated region
        $region49: #{tpu_custom_call.1} parent=11 // pred_check
          %p459 = pneg %p267
        $region50: #{tpu_custom_call.1} parent=11 // pred_check_branch
          %461 = sbr.rel (%p459) target = $region52
        $region51: #{tpu_custom_call.1} parent=11 // pred_region
          %s463 = ssub.s32 16, 16
          %464 = vsyncadd [#allocation19], %s463
          %s466 = sshll.u32 [#allocation20], 4
          %s467 = int_to_ptr.vmem [resolvable:$true] %s466
          %469 = dma.hbm_to_vmem [thread:$0]  %s10, 16, %s467, [#allocation19]
        $region52: #{tpu_custom_call.1} parent=11 // pred_fallthru
          _
        // Predicated region
        $region53: #{tpu_custom_call.1} parent=11 // pred_check
          %p470 = pneg %p288
        $region54: #{tpu_custom_call.1} parent=11 // pred_check_branch
          %472 = sbr.rel (%p470) target = $region56
        $region55: #{tpu_custom_call.1} parent=11 // pred_region
          %s474 = ssub.s32 16, 16
          %475 = vsyncadd [#allocation22], %s474
          %s477 = sshll.u32 [#allocation21], 4
          %s478 = int_to_ptr.vmem [resolvable:$true] %s477
          %480 = dma.hbm_to_vmem [thread:$0]  %s11, 16, %s478, [#allocation22]
        $region56: #{tpu_custom_call.1} parent=11 // pred_fallthru
          _
        // Predicated region
        $region57: #{tpu_custom_call.1} parent=11 // pred_check
          %p481 = pneg %p309
        $region58: #{tpu_custom_call.1} parent=11 // pred_check_branch
          %483 = sbr.rel (%p481) target = $region60
        $region59: #{tpu_custom_call.1} parent=11 // pred_region
          %s485 = ssub.s32 16, 16
          %486 = vsyncadd [#allocation22], %s485
          %s488 = sshll.u32 [#allocation23], 4
          %s489 = int_to_ptr.vmem [resolvable:$true] %s488
          %491 = dma.hbm_to_vmem [thread:$0]  %s12, 16, %s489, [#allocation22]
        $region60: #{tpu_custom_call.1} parent=11 // pred_fallthru
          _
      $region12: #{tpu_custom_call.1} parent=5 // pred_fallthru
        _
      %p492 = scmp.lt.s32.totalorder %s31, 2
      // Predicated region
      $region61: #{tpu_custom_call.1} parent=5 // pred_check
        %p493 = pneg %p492
      $region62: #{tpu_custom_call.1} parent=5 // pred_check_branch
        %495 = sbr.rel (%p493) target = $region64
      $region63: #{tpu_custom_call.1} parent=5 // pred_region
        // Predicated region
        $region65: #{tpu_custom_call.1} parent=63 // pred_check
          %p496 = pneg %p51
        $region66: #{tpu_custom_call.1} parent=63 // pred_check_branch
          %498 = sbr.rel (%p496) target = $region68
        $region67: #{tpu_custom_call.1} parent=63 // pred_region
          %s499 = sand.u32 %s41, 1
          %s500 = scalar_lea.sflag [#allocation4], %s499
          %s501 = sand.u32 %s41, 1
          %s502 = smul.addr %s501, 8
          %s503 = scalar_lea.vmem [#allocation3], %s502
          %s505 = ssub.s32 128, 128
          %506 = vsyncadd %s500, %s505
          %s507 = smul.addr %s31, 128
          %s508 = scalar_lea.hbm %s0, %s507
          %s510 = sshll.u32 %s503, 4
          %s511 = int_to_ptr.vmem [resolvable:$true] %s510
          %513 = dma.hbm_to_vmem [thread:$0]  %s508, 128, %s511, %s500
        $region68: #{tpu_custom_call.1} parent=63 // pred_fallthru
          _
      $region64: #{tpu_custom_call.1} parent=5 // pred_fallthru
        _
      %p514 = scmp.le.s32.totalorder 1, %s31
      %p515 = scmp.lt.s32.totalorder %s31, 3
      %p516 = pnand %p514, %p515
      %p517 = pneg %p516
      // Predicated region
      $region69: #{tpu_custom_call.1} parent=5 // pred_check
        _
      $region70: #{tpu_custom_call.1} parent=5 // pred_check_branch
        %519 = sbr.rel (%p516) target = $region72
      $region71: #{tpu_custom_call.1} parent=5 // pred_region
        %s520 = ssub.s32 %s31, 1
        %s521 = sand.u32 %s44, 1
        %s522 = scalar_lea.sflag [#allocation4], %s521
        %s523 = sand.u32 %s44, 1
        %s524 = smul.addr %s523, 8
        %s525 = scalar_lea.vmem [#allocation3], %s524
        // Predicated region
        $region73: #{tpu_custom_call.1} parent=71 // pred_check
          %p526 = pneg %p57
        $region74: #{tpu_custom_call.1} parent=71 // pred_check_branch
          %528 = sbr.rel (%p526) target = $region76
        $region75: #{tpu_custom_call.1} parent=71 // pred_region
          %529 = dma.done %s522, 128
        $region76: #{tpu_custom_call.1} parent=71 // pred_fallthru
          _
        // Predicated region
        $region77: #{tpu_custom_call.1} parent=71 // pred_check
          %p530 = pneg %p78
        $region78: #{tpu_custom_call.1} parent=71 // pred_check_branch
          %532 = sbr.rel (%p530) target = $region80
        $region79: #{tpu_custom_call.1} parent=71 // pred_region
          %533 = dma.done [#allocation7], 768
        $region80: #{tpu_custom_call.1} parent=71 // pred_fallthru
          _
        // Predicated region
        $region81: #{tpu_custom_call.1} parent=71 // pred_check
          %p534 = pneg %p99
        $region82: #{tpu_custom_call.1} parent=71 // pred_check_branch
          %536 = sbr.rel (%p534) target = $region84
        $region83: #{tpu_custom_call.1} parent=71 // pred_region
          %537 = dma.done [#allocation7], 48
        $region84: #{tpu_custom_call.1} parent=71 // pred_fallthru
          _
        // Predicated region
        $region85: #{tpu_custom_call.1} parent=71 // pred_check
          %p538 = pneg %p120
        $region86: #{tpu_custom_call.1} parent=71 // pred_check_branch
          %540 = sbr.rel (%p538) target = $region88
        $region87: #{tpu_custom_call.1} parent=71 // pred_region
          %541 = dma.done [#allocation10], 256
        $region88: #{tpu_custom_call.1} parent=71 // pred_fallthru
          _
        // Predicated region
        $region89: #{tpu_custom_call.1} parent=71 // pred_check
          %p542 = pneg %p141
        $region90: #{tpu_custom_call.1} parent=71 // pred_check_branch
          %544 = sbr.rel (%p542) target = $region92
        $region91: #{tpu_custom_call.1} parent=71 // pred_region
          %545 = dma.done [#allocation10], 16
        $region92: #{tpu_custom_call.1} parent=71 // pred_fallthru
          _
        // Predicated region
        $region93: #{tpu_custom_call.1} parent=71 // pred_check
          %p546 = pneg %p162
        $region94: #{tpu_custom_call.1} parent=71 // pred_check_branch
          %548 = sbr.rel (%p546) target = $region96
        $region95: #{tpu_custom_call.1} parent=71 // pred_region
          %549 = dma.done [#allocation13], 16
        $region96: #{tpu_custom_call.1} parent=71 // pred_fallthru
          _
        // Predicated region
        $region97: #{tpu_custom_call.1} parent=71 // pred_check
          %p550 = pneg %p183
        $region98: #{tpu_custom_call.1} parent=71 // pred_check_branch
          %552 = sbr.rel (%p550) target = $region100
        $region99: #{tpu_custom_call.1} parent=71 // pred_region
          %553 = dma.done [#allocation13], 16
        $region100: #{tpu_custom_call.1} parent=71 // pred_fallthru
          _
        // Predicated region
        $region101: #{tpu_custom_call.1} parent=71 // pred_check
          %p554 = pneg %p204
        $region102: #{tpu_custom_call.1} parent=71 // pred_check_branch
          %556 = sbr.rel (%p554) target = $region104
        $region103: #{tpu_custom_call.1} parent=71 // pred_region
          %557 = dma.done [#allocation16], 256
        $region104: #{tpu_custom_call.1} parent=71 // pred_fallthru
          _
        // Predicated region
        $region105: #{tpu_custom_call.1} parent=71 // pred_check
          %p558 = pneg %p225
        $region106: #{tpu_custom_call.1} parent=71 // pred_check_branch
          %560 = sbr.rel (%p558) target = $region108
        $region107: #{tpu_custom_call.1} parent=71 // pred_region
          %561 = dma.done [#allocation16], 16
        $region108: #{tpu_custom_call.1} parent=71 // pred_fallthru
          _
        // Predicated region
        $region109: #{tpu_custom_call.1} parent=71 // pred_check
          %p562 = pneg %p246
        $region110: #{tpu_custom_call.1} parent=71 // pred_check_branch
          %564 = sbr.rel (%p562) target = $region112
        $region111: #{tpu_custom_call.1} parent=71 // pred_region
          %565 = dma.done [#allocation19], 256
        $region112: #{tpu_custom_call.1} parent=71 // pred_fallthru
          _
        // Predicated region
        $region113: #{tpu_custom_call.1} parent=71 // pred_check
          %p566 = pneg %p267
        $region114: #{tpu_custom_call.1} parent=71 // pred_check_branch
          %568 = sbr.rel (%p566) target = $region116
        $region115: #{tpu_custom_call.1} parent=71 // pred_region
          %569 = dma.done [#allocation19], 16
        $region116: #{tpu_custom_call.1} parent=71 // pred_fallthru
          _
        // Predicated region
        $region117: #{tpu_custom_call.1} parent=71 // pred_check
          %p570 = pneg %p288
        $region118: #{tpu_custom_call.1} parent=71 // pred_check_branch
          %572 = sbr.rel (%p570) target = $region120
        $region119: #{tpu_custom_call.1} parent=71 // pred_region
          %573 = dma.done [#allocation22], 16
        $region120: #{tpu_custom_call.1} parent=71 // pred_fallthru
          _
        // Predicated region
        $region121: #{tpu_custom_call.1} parent=71 // pred_check
          %p574 = pneg %p309
        $region122: #{tpu_custom_call.1} parent=71 // pred_check_branch
          %576 = sbr.rel (%p574) target = $region124
        $region123: #{tpu_custom_call.1} parent=71 // pred_region
          %577 = dma.done [#allocation22], 16
        $region124: #{tpu_custom_call.1} parent=71 // pred_fallthru
          _
        %s578 = sand.u32 %s44, 1
        %s579 = scalar_lea.sflag [#allocation4], %s578
        %s580 = sand.u32 %s44, 1
        %s581 = smul.addr %s580, 8
        %s582 = scalar_lea.vmem [#allocation3], %s581
        %p583 = pneg %p57
        %p584 = pneg %p54
        %p585 = pneg %p78
        %p586 = pneg %p75
        %p587 = pneg %p99
        %p588 = pneg %p96
        %p589 = pneg %p120
        %p590 = pneg %p117
        %p591 = pneg %p141
        %p592 = pneg %p138
        %p593 = pneg %p162
        %p594 = pneg %p159
        %p595 = pneg %p183
        %p596 = pneg %p180
        %p597 = pneg %p204
        %p598 = pneg %p201
        %p599 = pneg %p225
        %p600 = pneg %p222
        %p601 = pneg %p246
        %p602 = pneg %p243
        %p603 = pneg %p267
        %p604 = pneg %p264
        %p605 = pneg %p288
        %p606 = pneg %p285
        %p607 = pneg %p309
        %p608 = pneg %p306
        %p609 = pneg %p335
        %p610 = pneg %p332
        %s611 = sand.u32 %s322, 1
        %s612 = scalar_lea.sflag [#allocation5], %s611
        %s613 = sand.u32 %s322, 1
        %s614 = smul.addr %s613, 8
        %s615 = scalar_lea.vmem [#allocation24], %s614
        %v617 = vld [vmem:[%s525] sm:$0xff]
        %v618 = vpack.c.bf16 %v617, %v617
        %v619 = vld [vmem:[#allocation6] sm:$0xf]
        %v620 = vld [vmem:[#allocation6 + $0x4] sm:$0xf]
        %v621 = vld [vmem:[#allocation6 + $0x8] sm:$0xf]
        %v622 = vld [vmem:[#allocation6 + $0xc] sm:$0xf]
        %v623 = vld [vmem:[#allocation8] sm:$0x1]
        %v625 = vlaneseq
        %v626 = vshrl.u32 %v625, 7
        %v627 = vsub.s32 0, %v626
        %v628 = vrot.slane %v623, %v627
        %v634 = vunpack.c.l.b16 %v619
        %v635 = vunpack.c.l.b16 %v620
        %v636 = vunpack.c.l.b16 %v621
        %v637 = vunpack.c.l.b16 %v622
        %v638 = vpack.c.b16 %v635, %v634
        %v639 = vpack.c.b16 %v637, %v636
        %vm642 = vcmask 261120
        %v644 = vsel %vm642, %v618, 0
        %646 = vmatprep.subr.bf16.mxu0 0
        %647 = vmatpush1.bf16.msra.mxu0 %v638
        %648 = vmatprep.subr.bf16.mxu0 0
        %649 = vmatpush1.bf16.msra.mxu0 %v639
        %650 = vmatprep.subr.bf16.mxu0 0
        %651 = vmatpush1.bf16.msra.mxu0 0
        %652 = vmatprep.subr.bf16.mxu0 0
        %653 = vmatpush1.bf16.msra.mxu0 0
        %654 = vmatprep.subr.bf16.mxu0 0
        %655 = vmatpush1.bf16.msra.mxu0 0
        %656 = vmatprep.subr.bf16.mxu0 0
        %657 = vmatpush1.bf16.msra.mxu0 0
        %658 = vmatprep.subr.bf16.mxu0 0
        %659 = vmatpush1.bf16.msra.mxu0 0
        %660 = vmatprep.subr.bf16.mxu0 0
        %661 = vmatpush1.bf16.msra.mxu0 0
        %662 = vmatprep.subr.bf16.mxu0 0
        %663 = vmatpush1.bf16.msra.mxu0 0
        %664 = vmatprep.subr.bf16.mxu0 0
        %665 = vmatpush1.bf16.msra.mxu0 0
        %666 = vmatprep.subr.bf16.mxu0 0
        %667 = vmatpush1.bf16.msra.mxu0 0
        %668 = vmatprep.subr.bf16.mxu0 0
        %669 = vmatpush1.bf16.msra.mxu0 0
        %670 = vmatprep.subr.bf16.mxu0 0
        %671 = vmatpush1.bf16.msra.mxu0 0
        %672 = vmatprep.subr.bf16.mxu0 0
        %673 = vmatpush1.bf16.msra.mxu0 0
        %674 = vmatprep.subr.bf16.mxu0 0
        %675 = vmatpush1.bf16.msra.mxu0 0
        %676 = vmatprep.subr.bf16.mxu0 0
        %677 = vmatpush1.bf16.msra.mxu0 0
        %678 = vmatprep.mubr.bf16.mxu0 0
        %679 = vmatmul.mubr.bf16.gmra.mrb[0].mxu0 %v644
        %v680 = vpop.f32.mrb[0].mxu0
        %v681 = vadd.f32 %v628, %v680
        %v682 = vpop.f32.mrb[0].mxu0
        %v683 = vpop.f32.mrb[0].mxu0
        %v684 = vpop.f32.mrb[0].mxu0
        %685 = vdwg.mxu0
        %s686 = scalar_lea.vmem [#allocation6], 16
        %v687 = vld [vmem:[%s686] sm:$0xf]
        %v688 = vld [vmem:[%s686 + $0x4] sm:$0xf]
        %v689 = vld [vmem:[%s686 + $0x8] sm:$0xf]
        %v690 = vld [vmem:[%s686 + $0xc] sm:$0xf]
        %s691 = scalar_lea.vmem [#allocation8], 1
        %v692 = vld [vmem:[%s691] sm:$0x1]
        %v694 = vlaneseq
        %v695 = vshrl.u32 %v694, 7
        %v696 = vsub.s32 0, %v695
        %v697 = vrot.slane %v692, %v696
        %v703 = vunpack.c.l.b16 %v687
        %v704 = vunpack.c.l.b16 %v688
        %v705 = vunpack.c.l.b16 %v689
        %v706 = vunpack.c.l.b16 %v690
        %v707 = vpack.c.b16 %v704, %v703
        %v708 = vpack.c.b16 %v706, %v705
        %711 = vmatprep.subr.bf16.mxu0 0
        %712 = vmatpush1.bf16.msra.mxu0 %v707
        %713 = vmatprep.subr.bf16.mxu0 0
        %714 = vmatpush1.bf16.msra.mxu0 %v708
        %715 = vmatprep.subr.bf16.mxu0 0
        %716 = vmatpush1.bf16.msra.mxu0 0
        %717 = vmatprep.subr.bf16.mxu0 0
        %718 = vmatpush1.bf16.msra.mxu0 0
        %719 = vmatprep.subr.bf16.mxu0 0
        %720 = vmatpush1.bf16.msra.mxu0 0
        %721 = vmatprep.subr.bf16.mxu0 0
        %722 = vmatpush1.bf16.msra.mxu0 0
        %723 = vmatprep.subr.bf16.mxu0 0
        %724 = vmatpush1.bf16.msra.mxu0 0
        %725 = vmatprep.subr.bf16.mxu0 0
        %726 = vmatpush1.bf16.msra.mxu0 0
        %727 = vmatprep.subr.bf16.mxu0 0
        %728 = vmatpush1.bf16.msra.mxu0 0
        %729 = vmatprep.subr.bf16.mxu0 0
        %730 = vmatpush1.bf16.msra.mxu0 0
        %731 = vmatprep.subr.bf16.mxu0 0
        %732 = vmatpush1.bf16.msra.mxu0 0
        %733 = vmatprep.subr.bf16.mxu0 0
        %734 = vmatpush1.bf16.msra.mxu0 0
        %735 = vmatprep.subr.bf16.mxu0 0
        %736 = vmatpush1.bf16.msra.mxu0 0
        %737 = vmatprep.subr.bf16.mxu0 0
        %738 = vmatpush1.bf16.msra.mxu0 0
        %739 = vmatprep.subr.bf16.mxu0 0
        %740 = vmatpush1.bf16.msra.mxu0 0
        %741 = vmatprep.subr.bf16.mxu0 0
        %742 = vmatpush1.bf16.msra.mxu0 0
        %743 = vmatprep.mubr.bf16.mxu0 0
        %744 = vmatmul.mubr.bf16.gmra.mrb[0].mxu0 %v644
        %v745 = vpop.f32.mrb[0].mxu0
        %v746 = vadd.f32 %v697, %v745
        %v747 = vpop.f32.mrb[0].mxu0
        %v748 = vpop.f32.mrb[0].mxu0
        %v749 = vpop.f32.mrb[0].mxu0
        %750 = vdwg.mxu0
        %s751 = scalar_lea.vmem [#allocation6], 32
        %v752 = vld [vmem:[%s751] sm:$0xf]
        %v753 = vld [vmem:[%s751 + $0x4] sm:$0xf]
        %v754 = vld [vmem:[%s751 + $0x8] sm:$0xf]
        %v755 = vld [vmem:[%s751 + $0xc] sm:$0xf]
        %s756 = scalar_lea.vmem [#allocation8], 2
        %v757 = vld [vmem:[%s756] sm:$0x1]
        %v759 = vlaneseq
        %v760 = vshrl.u32 %v759, 7
        %v761 = vsub.s32 0, %v760
        %v762 = vrot.slane %v757, %v761
        %v768 = vunpack.c.l.b16 %v752
        %v769 = vunpack.c.l.b16 %v753
        %v770 = vunpack.c.l.b16 %v754
        %v771 = vunpack.c.l.b16 %v755
        %v772 = vpack.c.b16 %v769, %v768
        %v773 = vpack.c.b16 %v771, %v770
        %776 = vmatprep.subr.bf16.mxu0 0
        %777 = vmatpush1.bf16.msra.mxu0 %v772
        %778 = vmatprep.subr.bf16.mxu0 0
        %779 = vmatpush1.bf16.msra.mxu0 %v773
        %780 = vmatprep.subr.bf16.mxu0 0
        %781 = vmatpush1.bf16.msra.mxu0 0
        %782 = vmatprep.subr.bf16.mxu0 0
        %783 = vmatpush1.bf16.msra.mxu0 0
        %784 = vmatprep.subr.bf16.mxu0 0
        %785 = vmatpush1.bf16.msra.mxu0 0
        %786 = vmatprep.subr.bf16.mxu0 0
        %787 = vmatpush1.bf16.msra.mxu0 0
        %788 = vmatprep.subr.bf16.mxu0 0
        %789 = vmatpush1.bf16.msra.mxu0 0
        %790 = vmatprep.subr.bf16.mxu0 0
        %791 = vmatpush1.bf16.msra.mxu0 0
        %792 = vmatprep.subr.bf16.mxu0 0
        %793 = vmatpush1.bf16.msra.mxu0 0
        %794 = vmatprep.subr.bf16.mxu0 0
        %795 = vmatpush1.bf16.msra.mxu0 0
        %796 = vmatprep.subr.bf16.mxu0 0
        %797 = vmatpush1.bf16.msra.mxu0 0
        %798 = vmatprep.subr.bf16.mxu0 0
        %799 = vmatpush1.bf16.msra.mxu0 0
        %800 = vmatprep.subr.bf16.mxu0 0
        %801 = vmatpush1.bf16.msra.mxu0 0
        %802 = vmatprep.subr.bf16.mxu0 0
        %803 = vmatpush1.bf16.msra.mxu0 0
        %804 = vmatprep.subr.bf16.mxu0 0
        %805 = vmatpush1.bf16.msra.mxu0 0
        %806 = vmatprep.subr.bf16.mxu0 0
        %807 = vmatpush1.bf16.msra.mxu0 0
        %808 = vmatprep.mubr.bf16.mxu0 0
        %809 = vmatmul.mubr.bf16.gmra.mrb[0].mxu0 %v644
        %v810 = vpop.f32.mrb[0].mxu0
        %v811 = vadd.f32 %v762, %v810
        %v812 = vpop.f32.mrb[0].mxu0
        %v813 = vpop.f32.mrb[0].mxu0
        %v814 = vpop.f32.mrb[0].mxu0
        %815 = vdwg.mxu0
        %v816 = vlaneseq
        %v817 = vshrl.u32 %v816, 7
        %v818 = vlaneseq
        %v819 = vand.u32 %v818, 127
        %vm820 = vcmp.gt.s32.totalorder %v819, %v817
        %v821 = vsel %vm820, -1e+30, 0.0
        %v822 = vpack.c.bf16 %v681, %v681
        %v823 = vpack.c.bf16 %v746, %v746
        %v824 = vpack.c.bf16 %v811, %v811
        %vm825 = vcmask 64512
        %v827 = vsel %vm825, %v822, 0
        %v830 = vsel %vm825, %v823, 0
        %832 = vmatprep.subr.bf16.mxu0 0
        %833 = vmatpush1.bf16.xpose.msra.mxu0 %v830
        %834 = vmatprep.subr.bf16.mxu0 0
        %835 = vmatpush1.bf16.xpose.msra.mxu0 0
        %836 = vmatprep.subr.bf16.mxu0 0
        %837 = vmatpush1.bf16.xpose.msra.mxu0 0
        %838 = vmatprep.subr.bf16.mxu0 0
        %839 = vmatpush1.bf16.xpose.msra.mxu0 0
        %840 = vmatprep.subr.bf16.mxu0 0
        %841 = vmatpush1.bf16.xpose.msra.mxu0 0
        %842 = vmatprep.subr.bf16.mxu0 0
        %843 = vmatpush1.bf16.xpose.msra.mxu0 0
        %844 = vmatprep.subr.bf16.mxu0 0
        %845 = vmatpush1.bf16.xpose.msra.mxu0 0
        %846 = vmatprep.subr.bf16.mxu0 0
        %847 = vmatpush1.bf16.xpose.msra.mxu0 0
        %848 = vmatprep.subr.bf16.mxu0 0
        %849 = vmatpush1.bf16.xpose.msra.mxu0 0
        %850 = vmatprep.subr.bf16.mxu0 0
        %851 = vmatpush1.bf16.xpose.msra.mxu0 0
        %852 = vmatprep.subr.bf16.mxu0 0
        %853 = vmatpush1.bf16.xpose.msra.mxu0 0
        %854 = vmatprep.subr.bf16.mxu0 0
        %855 = vmatpush1.bf16.xpose.msra.mxu0 0
        %856 = vmatprep.subr.bf16.mxu0 0
        %857 = vmatpush1.bf16.xpose.msra.mxu0 0
        %858 = vmatprep.subr.bf16.mxu0 0
        %859 = vmatpush1.bf16.xpose.msra.mxu0 0
        %860 = vmatprep.subr.bf16.mxu0 0
        %861 = vmatpush1.bf16.xpose.msra.mxu0 0
        %862 = vmatprep.subr.bf16.mxu0 0
        %863 = vmatpush1.bf16.xpose.msra.mxu0 0
        %864 = vmatprep.mubr.bf16.mxu0 0
        %865 = vmatmul.mubr.bf16.gmra.mrb[0].mxu0 %v827
        %v866 = vpop.f32.mrb[0].mxu0
        %v867 = vadd.f32 %v821, %v866
        %v868 = vpop.f32.mrb[0].mxu0
        %v869 = vpop.f32.mrb[0].mxu0
        %v870 = vpop.f32.mrb[0].mxu0
        %871 = vdwg.mxu0
        %v872 = vsel %vm825, %v867, -inf
        %873 = vmax.xlane.f32.xlu0 %v872
        %v874 = vpop.xlane.xlu0 %873
        %v875 = vsub.f32 %v867, %v874
        %v876 = vmul.f32 %v875, 1.442695
        %v877 = vpow.pop %v876
        %v878 = vsel %vm825, %v877, 0.0
        %879 = vadd.xlane.f32.xlu0 %v878
        %v880 = vpop.xlane.xlu0 %879
        %v881 = vrcp.pop %v880
        %v882 = vmul.f32 %v877, %v881
        %v883 = vpack.c.bf16 %v882, %v882
        %v885 = vsel %vm825, %v883, 0
        %vm887 = vcmask 1043456
        %v889 = vsel %vm887, %v824, 0
        %891 = vmatprep.subr.bf16.mxu0 0
        %892 = vmatpush1.bf16.msra.mxu0 %v889
        %893 = vmatprep.subr.bf16.mxu0 0
        %894 = vmatpush1.bf16.msra.mxu0 0
        %895 = vmatprep.subr.bf16.mxu0 0
        %896 = vmatpush1.bf16.msra.mxu0 0
        %897 = vmatprep.subr.bf16.mxu0 0
        %898 = vmatpush1.bf16.msra.mxu0 0
        %899 = vmatprep.subr.bf16.mxu0 0
        %900 = vmatpush1.bf16.msra.mxu0 0
        %901 = vmatprep.subr.bf16.mxu0 0
        %902 = vmatpush1.bf16.msra.mxu0 0
        %903 = vmatprep.subr.bf16.mxu0 0
        %904 = vmatpush1.bf16.msra.mxu0 0
        %905 = vmatprep.subr.bf16.mxu0 0
        %906 = vmatpush1.bf16.msra.mxu0 0
        %907 = vmatprep.subr.bf16.mxu0 0
        %908 = vmatpush1.bf16.msra.mxu0 0
        %909 = vmatprep.subr.bf16.mxu0 0
        %910 = vmatpush1.bf16.msra.mxu0 0
        %911 = vmatprep.subr.bf16.mxu0 0
        %912 = vmatpush1.bf16.msra.mxu0 0
        %913 = vmatprep.subr.bf16.mxu0 0
        %914 = vmatpush1.bf16.msra.mxu0 0
        %915 = vmatprep.subr.bf16.mxu0 0
        %916 = vmatpush1.bf16.msra.mxu0 0
        %917 = vmatprep.subr.bf16.mxu0 0
        %918 = vmatpush1.bf16.msra.mxu0 0
        %919 = vmatprep.subr.bf16.mxu0 0
        %920 = vmatpush1.bf16.msra.mxu0 0
        %921 = vmatprep.subr.bf16.mxu0 0
        %922 = vmatpush1.bf16.msra.mxu0 0
        %923 = vmatprep.mubr.bf16.mxu0 0
        %924 = vmatmul.mubr.bf16.gmra.mrb[0].mxu0 %v885
        %v925 = vpop.f32.mrb[0].mxu0
        %v926 = vadd.f32 0.0, %v925
        %v927 = vpop.f32.mrb[0].mxu0
        %v928 = vpop.f32.mrb[0].mxu0
        %v929 = vpop.f32.mrb[0].mxu0
        %930 = vdwg.mxu0
        %931 = vst.msk [vmem:[#allocation2] sm:$0xff] %vm825, %v926
        %933 = vrot.lane.b32.xlu0 %v822, 120
        %v934 = vpop.permute.xlu0 %933
        %936 = vrot.lane.b32.xlu0 %v823, 120
        %v937 = vpop.permute.xlu0 %936
        %v939 = vsel %vm825, %v934, 0
        %v942 = vsel %vm825, %v937, 0
        %944 = vmatprep.subr.bf16.mxu0 0
        %945 = vmatpush1.bf16.xpose.msra.mxu0 %v942
        %946 = vmatprep.subr.bf16.mxu0 0
        %947 = vmatpush1.bf16.xpose.msra.mxu0 0
        %948 = vmatprep.subr.bf16.mxu0 0
        %949 = vmatpush1.bf16.xpose.msra.mxu0 0
        %950 = vmatprep.subr.bf16.mxu0 0
        %951 = vmatpush1.bf16.xpose.msra.mxu0 0
        %952 = vmatprep.subr.bf16.mxu0 0
        %953 = vmatpush1.bf16.xpose.msra.mxu0 0
        %954 = vmatprep.subr.bf16.mxu0 0
        %955 = vmatpush1.bf16.xpose.msra.mxu0 0
        %956 = vmatprep.subr.bf16.mxu0 0
        %957 = vmatpush1.bf16.xpose.msra.mxu0 0
        %958 = vmatprep.subr.bf16.mxu0 0
        %959 = vmatpush1.bf16.xpose.msra.mxu0 0
        %960 = vmatprep.subr.bf16.mxu0 0
        %961 = vmatpush1.bf16.xpose.msra.mxu0 0
        %962 = vmatprep.subr.bf16.mxu0 0
        %963 = vmatpush1.bf16.xpose.msra.mxu0 0
        %964 = vmatprep.subr.bf16.mxu0 0
        %965 = vmatpush1.bf16.xpose.msra.mxu0 0
        %966 = vmatprep.subr.bf16.mxu0 0
        %967 = vmatpush1.bf16.xpose.msra.mxu0 0
        %968 = vmatprep.subr.bf16.mxu0 0
        %969 = vmatpush1.bf16.xpose.msra.mxu0 0
        %970 = vmatprep.subr.bf16.mxu0 0
        %971 = vmatpush1.bf16.xpose.msra.mxu0 0
        %972 = vmatprep.subr.bf16.mxu0 0
        %973 = vmatpush1.bf16.xpose.msra.mxu0 0
        %974 = vmatprep.subr.bf16.mxu0 0
        %975 = vmatpush1.bf16.xpose.msra.mxu0 0
        %976 = vmatprep.mubr.bf16.mxu0 0
        %977 = vmatmul.mubr.bf16.gmra.mrb[0].mxu0 %v939
        %v978 = vpop.f32.mrb[0].mxu0
        %v979 = vadd.f32 %v821, %v978
        %v980 = vpop.f32.mrb[0].mxu0
        %v981 = vpop.f32.mrb[0].mxu0
        %v982 = vpop.f32.mrb[0].mxu0
        %983 = vdwg.mxu0
        %v984 = vsel %vm825, %v979, -inf
        %985 = vmax.xlane.f32.xlu0 %v984
        %v986 = vpop.xlane.xlu0 %985
        %v987 = vsub.f32 %v979, %v986
        %v988 = vmul.f32 %v987, 1.442695
        %v989 = vpow.pop %v988
        %v990 = vsel %vm825, %v989, 0.0
        %991 = vadd.xlane.f32.xlu0 %v990
        %v992 = vpop.xlane.xlu0 %991
        %v993 = vrcp.pop %v992
        %v994 = vmul.f32 %v989, %v993
        %v995 = vpack.c.bf16 %v994, %v994
        %997 = vrot.lane.b32.xlu0 %v824, 120
        %v998 = vpop.permute.xlu0 %997
        %v1000 = vsel %vm825, %v995, 0
        %v1003 = vsel %vm887, %v998, 0
        %1005 = vmatprep.subr.bf16.mxu0 0
        %1006 = vmatpush1.bf16.msra.mxu0 %v1003
        %1007 = vmatprep.subr.bf16.mxu0 0
        %1008 = vmatpush1.bf16.msra.mxu0 0
        %1009 = vmatprep.subr.bf16.mxu0 0
        %1010 = vmatpush1.bf16.msra.mxu0 0
        %1011 = vmatprep.subr.bf16.mxu0 0
        %1012 = vmatpush1.bf16.msra.mxu0 0
        %1013 = vmatprep.subr.bf16.mxu0 0
        %1014 = vmatpush1.bf16.msra.mxu0 0
        %1015 = vmatprep.subr.bf16.mxu0 0
        %1016 = vmatpush1.bf16.msra.mxu0 0
        %1017 = vmatprep.subr.bf16.mxu0 0
        %1018 = vmatpush1.bf16.msra.mxu0 0
        %1019 = vmatprep.subr.bf16.mxu0 0
        %1020 = vmatpush1.bf16.msra.mxu0 0
        %1021 = vmatprep.subr.bf16.mxu0 0
        %1022 = vmatpush1.bf16.msra.mxu0 0
        %1023 = vmatprep.subr.bf16.mxu0 0
        %1024 = vmatpush1.bf16.msra.mxu0 0
        %1025 = vmatprep.subr.bf16.mxu0 0
        %1026 = vmatpush1.bf16.msra.mxu0 0
        %1027 = vmatprep.subr.bf16.mxu0 0
        %1028 = vmatpush1.bf16.msra.mxu0 0
        %1029 = vmatprep.subr.bf16.mxu0 0
        %1030 = vmatpush1.bf16.msra.mxu0 0
        %1031 = vmatprep.subr.bf16.mxu0 0
        %1032 = vmatpush1.bf16.msra.mxu0 0
        %1033 = vmatprep.subr.bf16.mxu0 0
        %1034 = vmatpush1.bf16.msra.mxu0 0
        %1035 = vmatprep.subr.bf16.mxu0 0
        %1036 = vmatpush1.bf16.msra.mxu0 0
        %1037 = vmatprep.mubr.bf16.mxu0 0
        %1038 = vmatmul.mubr.bf16.gmra.mrb[0].mxu0 %v1000
        %v1039 = vpop.f32.mrb[0].mxu0
        %v1040 = vadd.f32 0.0, %v1039
        %v1041 = vpop.f32.mrb[0].mxu0
        %v1042 = vpop.f32.mrb[0].mxu0
        %v1043 = vpop.f32.mrb[0].mxu0
        %1044 = vdwg.mxu0
        %1046 = vrot.lane.b32.xlu0 %v1040, 8
        %v1047 = vpop.permute.xlu0 %1046
        %vm1049 = vcmask 130112
        %1050 = vst.msk [vmem:[#allocation2] sm:$0xff] %vm1049, %v1047
        %1051 = vrot.lane.b32.xlu0 %v822, 112
        %v1052 = vpop.permute.xlu0 %1051
        %1053 = vrot.lane.b32.xlu0 %v823, 112
        %v1054 = vpop.permute.xlu0 %1053
        %v1056 = vsel %vm825, %v1052, 0
        %v1059 = vsel %vm825, %v1054, 0
        %1061 = vmatprep.subr.bf16.mxu0 0
        %1062 = vmatpush1.bf16.xpose.msra.mxu0 %v1059
        %1063 = vmatprep.subr.bf16.mxu0 0
        %1064 = vmatpush1.bf16.xpose.msra.mxu0 0
        %1065 = vmatprep.subr.bf16.mxu0 0
        %1066 = vmatpush1.bf16.xpose.msra.mxu0 0
        %1067 = vmatprep.subr.bf16.mxu0 0
        %1068 = vmatpush1.bf16.xpose.msra.mxu0 0
        %1069 = vmatprep.subr.bf16.mxu0 0
        %1070 = vmatpush1.bf16.xpose.msra.mxu0 0
        %1071 = vmatprep.subr.bf16.mxu0 0
        %1072 = vmatpush1.bf16.xpose.msra.mxu0 0
        %1073 = vmatprep.subr.bf16.mxu0 0
        %1074 = vmatpush1.bf16.xpose.msra.mxu0 0
        %1075 = vmatprep.subr.bf16.mxu0 0
        %1076 = vmatpush1.bf16.xpose.msra.mxu0 0
        %1077 = vmatprep.subr.bf16.mxu0 0
        %1078 = vmatpush1.bf16.xpose.msra.mxu0 0
        %1079 = vmatprep.subr.bf16.mxu0 0
        %1080 = vmatpush1.bf16.xpose.msra.mxu0 0
        %1081 = vmatprep.subr.bf16.mxu0 0
        %1082 = vmatpush1.bf16.xpose.msra.mxu0 0
        %1083 = vmatprep.subr.bf16.mxu0 0
        %1084 = vmatpush1.bf16.xpose.msra.mxu0 0
        %1085 = vmatprep.subr.bf16.mxu0 0
        %1086 = vmatpush1.bf16.xpose.msra.mxu0 0
        %1087 = vmatprep.subr.bf16.mxu0 0
        %1088 = vmatpush1.bf16.xpose.msra.mxu0 0
        %1089 = vmatprep.subr.bf16.mxu0 0
        %1090 = vmatpush1.bf16.xpose.msra.mxu0 0
        %1091 = vmatprep.subr.bf16.mxu0 0
        %1092 = vmatpush1.bf16.xpose.msra.mxu0 0
        %1093 = vmatprep.mubr.bf16.mxu0 0
        %1094 = vmatmul.mubr.bf16.gmra.mrb[0].mxu0 %v1056
        %v1095 = vpop.f32.mrb[0].mxu0
        %v1096 = vadd.f32 %v821, %v1095
        %v1097 = vpop.f32.mrb[0].mxu0
        %v1098 = vpop.f32.mrb[0].mxu0
        %v1099 = vpop.f32.mrb[0].mxu0
        %1100 = vdwg.mxu0
        %v1101 = vsel %vm825, %v1096, -inf
        %1102 = vmax.xlane.f32.xlu0 %v1101
        %v1103 = vpop.xlane.xlu0 %1102
        %v1104 = vsub.f32 %v1096, %v1103
        %v1105 = vmul.f32 %v1104, 1.442695
        %v1106 = vpow.pop %v1105
        %v1107 = vsel %vm825, %v1106, 0.0
        %1108 = vadd.xlane.f32.xlu0 %v1107
        %v1109 = vpop.xlane.xlu0 %1108
        %v1110 = vrcp.pop %v1109
        %v1111 = vmul.f32 %v1106, %v1110
        %v1112 = vpack.c.bf16 %v1111, %v1111
        %1113 = vrot.lane.b32.xlu0 %v824, 112
        %v1114 = vpop.permute.xlu0 %1113
        %v1116 = vsel %vm825, %v1112, 0
        %v1119 = vsel %vm887, %v1114, 0
        %1121 = vmatprep.subr.bf16.mxu0 0
        %1122 = vmatpush1.bf16.msra.mxu0 %v1119
        %1123 = vmatprep.subr.bf16.mxu0 0
        %1124 = vmatpush1.bf16.msra.mxu0 0
        %1125 = vmatprep.subr.bf16.mxu0 0
        %1126 = vmatpush1.bf16.msra.mxu0 0
        %1127 = vmatprep.subr.bf16.mxu0 0
        %1128 = vmatpush1.bf16.msra.mxu0 0
        %1129 = vmatprep.subr.bf16.mxu0 0
        %1130 = vmatpush1.bf16.msra.mxu0 0
        %1131 = vmatprep.subr.bf16.mxu0 0
        %1132 = vmatpush1.bf16.msra.mxu0 0
        %1133 = vmatprep.subr.bf16.mxu0 0
        %1134 = vmatpush1.bf16.msra.mxu0 0
        %1135 = vmatprep.subr.bf16.mxu0 0
        %1136 = vmatpush1.bf16.msra.mxu0 0
        %1137 = vmatprep.subr.bf16.mxu0 0
        %1138 = vmatpush1.bf16.msra.mxu0 0
        %1139 = vmatprep.subr.bf16.mxu0 0
        %1140 = vmatpush1.bf16.msra.mxu0 0
        %1141 = vmatprep.subr.bf16.mxu0 0
        %1142 = vmatpush1.bf16.msra.mxu0 0
        %1143 = vmatprep.subr.bf16.mxu0 0
        %1144 = vmatpush1.bf16.msra.mxu0 0
        %1145 = vmatprep.subr.bf16.mxu0 0
        %1146 = vmatpush1.bf16.msra.mxu0 0
        %1147 = vmatprep.subr.bf16.mxu0 0
        %1148 = vmatpush1.bf16.msra.mxu0 0
        %1149 = vmatprep.subr.bf16.mxu0 0
        %1150 = vmatpush1.bf16.msra.mxu0 0
        %1151 = vmatprep.subr.bf16.mxu0 0
        %1152 = vmatpush1.bf16.msra.mxu0 0
        %1153 = vmatprep.mubr.bf16.mxu0 0
        %1154 = vmatmul.mubr.bf16.gmra.mrb[0].mxu0 %v1116
        %v1155 = vpop.f32.mrb[0].mxu0
        %v1156 = vadd.f32 0.0, %v1155
        %v1157 = vpop.f32.mrb[0].mxu0
        %v1158 = vpop.f32.mrb[0].mxu0
        %v1159 = vpop.f32.mrb[0].mxu0
        %1160 = vdwg.mxu0
        %1162 = vrot.lane.b32.xlu0 %v1156, 16
        %v1163 = vpop.permute.xlu0 %1162
        %vm1165 = vcmask 195712
        %1166 = vst.msk [vmem:[#allocation2] sm:$0xff] %vm1165, %v1163
        %1167 = vrot.lane.b32.xlu0 %v822, 104
        %v1168 = vpop.permute.xlu0 %1167
        %1169 = vrot.lane.b32.xlu0 %v823, 104
        %v1170 = vpop.permute.xlu0 %1169
        %v1172 = vsel %vm825, %v1168, 0
        %v1175 = vsel %vm825, %v1170, 0
        %1177 = vmatprep.subr.bf16.mxu0 0
        %1178 = vmatpush1.bf16.xpose.msra.mxu0 %v1175
        %1179 = vmatprep.subr.bf16.mxu0 0
        %1180 = vmatpush1.bf16.xpose.msra.mxu0 0
        %1181 = vmatprep.subr.bf16.mxu0 0
        %1182 = vmatpush1.bf16.xpose.msra.mxu0 0
        %1183 = vmatprep.subr.bf16.mxu0 0
        %1184 = vmatpush1.bf16.xpose.msra.mxu0 0
        %1185 = vmatprep.subr.bf16.mxu0 0
        %1186 = vmatpush1.bf16.xpose.msra.mxu0 0
        %1187 = vmatprep.subr.bf16.mxu0 0
        %1188 = vmatpush1.bf16.xpose.msra.mxu0 0
        %1189 = vmatprep.subr.bf16.mxu0 0
        %1190 = vmatpush1.bf16.xpose.msra.mxu0 0
        %1191 = vmatprep.subr.bf16.mxu0 0
        %1192 = vmatpush1.bf16.xpose.msra.mxu0 0
        %1193 = vmatprep.subr.bf16.mxu0 0
        %1194 = vmatpush1.bf16.xpose.msra.mxu0 0
        %1195 = vmatprep.subr.bf16.mxu0 0
        %1196 = vmatpush1.bf16.xpose.msra.mxu0 0
        %1197 = vmatprep.subr.bf16.mxu0 0
        %1198 = vmatpush1.bf16.xpose.msra.mxu0 0
        %1199 = vmatprep.subr.bf16.mxu0 0
        %1200 = vmatpush1.bf16.xpose.msra.mxu0 0
        %1201 = vmatprep.subr.bf16.mxu0 0
        %1202 = vmatpush1.bf16.xpose.msra.mxu0 0
        %1203 = vmatprep.subr.bf16.mxu0 0
        %1204 = vmatpush1.bf16.xpose.msra.mxu0 0
        %1205 = vmatprep.subr.bf16.mxu0 0
        %1206 = vmatpush1.bf16.xpose.msra.mxu0 0
        %1207 = vmatprep.subr.bf16.mxu0 0
        %1208 = vmatpush1.bf16.xpose.msra.mxu0 0
        %1209 = vmatprep.mubr.bf16.mxu0 0
        %1210 = vmatmul.mubr.bf16.gmra.mrb[0].mxu0 %v1172
        %v1211 = vpop.f32.mrb[0].mxu0
        %v1212 = vadd.f32 %v821, %v1211
        %v1213 = vpop.f32.mrb[0].mxu0
        %v1214 = vpop.f32.mrb[0].mxu0
        %v1215 = vpop.f32.mrb[0].mxu0
        %1216 = vdwg.mxu0
        %v1217 = vsel %vm825, %v1212, -inf
        %1218 = vmax.xlane.f32.xlu0 %v1217
        %v1219 = vpop.xlane.xlu0 %1218
        %v1220 = vsub.f32 %v1212, %v1219
        %v1221 = vmul.f32 %v1220, 1.442695
        %v1222 = vpow.pop %v1221
        %v1223 = vsel %vm825, %v1222, 0.0
        %1224 = vadd.xlane.f32.xlu0 %v1223
        %v1225 = vpop.xlane.xlu0 %1224
        %v1226 = vrcp.pop %v1225
        %v1227 = vmul.f32 %v1222, %v1226
        %v1228 = vpack.c.bf16 %v1227, %v1227
        %1229 = vrot.lane.b32.xlu0 %v824, 104
        %v1230 = vpop.permute.xlu0 %1229
        %v1232 = vsel %vm825, %v1228, 0
        %v1235 = vsel %vm887, %v1230, 0
        %1237 = vmatprep.subr.bf16.mxu0 0
        %1238 = vmatpush1.bf16.msra.mxu0 %v1235
        %1239 = vmatprep.subr.bf16.mxu0 0
        %1240 = vmatpush1.bf16.msra.mxu0 0
        %1241 = vmatprep.subr.bf16.mxu0 0
        %1242 = vmatpush1.bf16.msra.mxu0 0
        %1243 = vmatprep.subr.bf16.mxu0 0
        %1244 = vmatpush1.bf16.msra.mxu0 0
        %1245 = vmatprep.subr.bf16.mxu0 0
        %1246 = vmatpush1.bf16.msra.mxu0 0
        %1247 = vmatprep.subr.bf16.mxu0 0
        %1248 = vmatpush1.bf16.msra.mxu0 0
        %1249 = vmatprep.subr.bf16.mxu0 0
        %1250 = vmatpush1.bf16.msra.mxu0 0
        %1251 = vmatprep.subr.bf16.mxu0 0
        %1252 = vmatpush1.bf16.msra.mxu0 0
        %1253 = vmatprep.subr.bf16.mxu0 0
        %1254 = vmatpush1.bf16.msra.mxu0 0
        %1255 = vmatprep.subr.bf16.mxu0 0
        %1256 = vmatpush1.bf16.msra.mxu0 0
        %1257 = vmatprep.subr.bf16.mxu0 0
        %1258 = vmatpush1.bf16.msra.mxu0 0
        %1259 = vmatprep.subr.bf16.mxu0 0
        %1260 = vmatpush1.bf16.msra.mxu0 0
        %1261 = vmatprep.subr.bf16.mxu0 0
        %1262 = vmatpush1.bf16.msra.mxu0 0
        %1263 = vmatprep.subr.bf16.mxu0 0
        %1264 = vmatpush1.bf16.msra.mxu0 0
        %1265 = vmatprep.subr.bf16.mxu0 0
        %1266 = vmatpush1.bf16.msra.mxu0 0
        %1267 = vmatprep.subr.bf16.mxu0 0
        %1268 = vmatpush1.bf16.msra.mxu0 0
        %1269 = vmatprep.mubr.bf16.mxu0 0
        %1270 = vmatmul.mubr.bf16.gmra.mrb[0].mxu0 %v1232
        %v1271 = vpop.f32.mrb[0].mxu0
        %v1272 = vadd.f32 0.0, %v1271
        %v1273 = vpop.f32.mrb[0].mxu0
        %v1274 = vpop.f32.mrb[0].mxu0
        %v1275 = vpop.f32.mrb[0].mxu0
        %1276 = vdwg.mxu0
        %1278 = vrot.lane.b32.xlu0 %v1272, 24
        %v1279 = vpop.permute.xlu0 %1278
        %vm1281 = vcmask 261312
        %1282 = vst.msk [vmem:[#allocation2] sm:$0xff] %vm1281, %v1279
        %v1283 = vld [vmem:[#allocation2] sm:$0xff]
        %v1284 = vpack.c.bf16 %v1283, %v1283
        %v1285 = vld [vmem:[#allocation9] sm:$0xf]
        %v1286 = vld [vmem:[#allocation9 + $0x4] sm:$0xf]
        %v1287 = vld [vmem:[#allocation9 + $0x8] sm:$0xf]
        %v1288 = vld [vmem:[#allocation9 + $0xc] sm:$0xf]
        %v1289 = vld [vmem:[#allocation11] sm:$0x1]
        %v1291 = vlaneseq
        %v1292 = vshrl.u32 %v1291, 7
        %v1293 = vsub.s32 0, %v1292
        %v1294 = vrot.slane %v1289, %v1293
        %v1300 = vunpack.c.l.b16 %v1285
        %v1301 = vunpack.c.l.b16 %v1286
        %v1302 = vunpack.c.l.b16 %v1287
        %v1303 = vunpack.c.l.b16 %v1288
        %v1304 = vpack.c.b16 %v1301, %v1300
        %v1305 = vpack.c.b16 %v1303, %v1302
        %v1309 = vsel %vm642, %v1284, 0
        %1311 = vmatprep.subr.bf16.mxu0 0
        %1312 = vmatpush1.bf16.msra.mxu0 %v1304
        %1313 = vmatprep.subr.bf16.mxu0 0
        %1314 = vmatpush1.bf16.msra.mxu0 %v1305
        %1315 = vmatprep.subr.bf16.mxu0 0
        %1316 = vmatpush1.bf16.msra.mxu0 0
        %1317 = vmatprep.subr.bf16.mxu0 0
        %1318 = vmatpush1.bf16.msra.mxu0 0
        %1319 = vmatprep.subr.bf16.mxu0 0
        %1320 = vmatpush1.bf16.msra.mxu0 0
        %1321 = vmatprep.subr.bf16.mxu0 0
        %1322 = vmatpush1.bf16.msra.mxu0 0
        %1323 = vmatprep.subr.bf16.mxu0 0
        %1324 = vmatpush1.bf16.msra.mxu0 0
        %1325 = vmatprep.subr.bf16.mxu0 0
        %1326 = vmatpush1.bf16.msra.mxu0 0
        %1327 = vmatprep.subr.bf16.mxu0 0
        %1328 = vmatpush1.bf16.msra.mxu0 0
        %1329 = vmatprep.subr.bf16.mxu0 0
        %1330 = vmatpush1.bf16.msra.mxu0 0
        %1331 = vmatprep.subr.bf16.mxu0 0
        %1332 = vmatpush1.bf16.msra.mxu0 0
        %1333 = vmatprep.subr.bf16.mxu0 0
        %1334 = vmatpush1.bf16.msra.mxu0 0
        %1335 = vmatprep.subr.bf16.mxu0 0
        %1336 = vmatpush1.bf16.msra.mxu0 0
        %1337 = vmatprep.subr.bf16.mxu0 0
        %1338 = vmatpush1.bf16.msra.mxu0 0
        %1339 = vmatprep.subr.bf16.mxu0 0
        %1340 = vmatpush1.bf16.msra.mxu0 0
        %1341 = vmatprep.subr.bf16.mxu0 0
        %1342 = vmatpush1.bf16.msra.mxu0 0
        %1343 = vmatprep.mubr.bf16.mxu0 0
        %1344 = vmatmul.mubr.bf16.gmra.mrb[0].mxu0 %v1309
        %v1345 = vpop.f32.mrb[0].mxu0
        %v1346 = vadd.f32 %v1294, %v1345
        %v1347 = vpop.f32.mrb[0].mxu0
        %v1348 = vpop.f32.mrb[0].mxu0
        %v1349 = vpop.f32.mrb[0].mxu0
        %1350 = vdwg.mxu0
        %v1351 = vadd.f32 %v1346, %v617
        %v1352 = vld [vmem:[#allocation12] sm:$0x1]
        %v1353 = vld [vmem:[#allocation14] sm:$0x1]
        %v1354 = vsel %vm642, %v1351, 0.0
        %1355 = vadd.xlane.f32.xlu0 %v1354
        %v1356 = vpop.xlane.xlu0 %1355
        %v1357 = vrcp.pop 32.0
        %v1358 = vmul.f32 %v1356, %v1357
        %v1359 = vsub.f32 %v1351, %v1358
        %v1360 = vmul.f32 %v1359, %v1359
        %v1361 = vsel %vm642, %v1360, 0.0
        %1362 = vadd.xlane.f32.xlu0 %v1361
        %v1363 = vpop.xlane.xlu0 %1362
        %v1364 = vmul.f32 %v1363, %v1357
        %v1365 = vadd.f32 %v1364, 1e-05
        %v1366 = vrsqrt.pop %v1365
        %v1367 = vmul.f32 %v1359, %v1366
        %v1369 = vlaneseq
        %v1370 = vshrl.u32 %v1369, 7
        %v1371 = vsub.s32 0, %v1370
        %v1372 = vrot.slane %v1352, %v1371
        %v1374 = vmul.f32 %v1367, %v1372
        %v1376 = vlaneseq
        %v1377 = vshrl.u32 %v1376, 7
        %v1378 = vsub.s32 0, %v1377
        %v1379 = vrot.slane %v1353, %v1378
        %v1381 = vadd.f32 %v1374, %v1379
        %v1382 = vpack.c.bf16 %v1381, %v1381
        %v1383 = vld [vmem:[#allocation15] sm:$0xf]
        %v1384 = vld [vmem:[#allocation15 + $0x4] sm:$0xf]
        %v1385 = vld [vmem:[#allocation15 + $0x8] sm:$0xf]
        %v1386 = vld [vmem:[#allocation15 + $0xc] sm:$0xf]
        %v1387 = vld [vmem:[#allocation17] sm:$0x1]
        %v1389 = vlaneseq
        %v1390 = vshrl.u32 %v1389, 7
        %v1391 = vsub.s32 0, %v1390
        %v1392 = vrot.slane %v1387, %v1391
        %v1398 = vunpack.c.l.b16 %v1383
        %v1399 = vunpack.c.l.b16 %v1384
        %v1400 = vunpack.c.l.b16 %v1385
        %v1401 = vunpack.c.l.b16 %v1386
        %v1402 = vpack.c.b16 %v1399, %v1398
        %v1403 = vpack.c.b16 %v1401, %v1400
        %v1407 = vsel %vm642, %v1382, 0
        %1409 = vmatprep.subr.bf16.mxu0 0
        %1410 = vmatpush1.bf16.msra.mxu0 %v1402
        %1411 = vmatprep.subr.bf16.mxu0 0
        %1412 = vmatpush1.bf16.msra.mxu0 %v1403
        %1413 = vmatprep.subr.bf16.mxu0 0
        %1414 = vmatpush1.bf16.msra.mxu0 0
        %1415 = vmatprep.subr.bf16.mxu0 0
        %1416 = vmatpush1.bf16.msra.mxu0 0
        %1417 = vmatprep.subr.bf16.mxu0 0
        %1418 = vmatpush1.bf16.msra.mxu0 0
        %1419 = vmatprep.subr.bf16.mxu0 0
        %1420 = vmatpush1.bf16.msra.mxu0 0
        %1421 = vmatprep.subr.bf16.mxu0 0
        %1422 = vmatpush1.bf16.msra.mxu0 0
        %1423 = vmatprep.subr.bf16.mxu0 0
        %1424 = vmatpush1.bf16.msra.mxu0 0
        %1425 = vmatprep.subr.bf16.mxu0 0
        %1426 = vmatpush1.bf16.msra.mxu0 0
        %1427 = vmatprep.subr.bf16.mxu0 0
        %1428 = vmatpush1.bf16.msra.mxu0 0
        %1429 = vmatprep.subr.bf16.mxu0 0
        %1430 = vmatpush1.bf16.msra.mxu0 0
        %1431 = vmatprep.subr.bf16.mxu0 0
        %1432 = vmatpush1.bf16.msra.mxu0 0
        %1433 = vmatprep.subr.bf16.mxu0 0
        %1434 = vmatpush1.bf16.msra.mxu0 0
        %1435 = vmatprep.subr.bf16.mxu0 0
        %1436 = vmatpush1.bf16.msra.mxu0 0
        %1437 = vmatprep.subr.bf16.mxu0 0
        %1438 = vmatpush1.bf16.msra.mxu0 0
        %1439 = vmatprep.subr.bf16.mxu0 0
        %1440 = vmatpush1.bf16.msra.mxu0 0
        %1441 = vmatprep.mubr.bf16.mxu0 0
        %1442 = vmatmul.mubr.bf16.gmra.mrb[0].mxu0 %v1407
        %v1443 = vpop.f32.mrb[0].mxu0
        %v1444 = vadd.f32 %v1392, %v1443
        %v1445 = vpop.f32.mrb[0].mxu0
        %v1446 = vpop.f32.mrb[0].mxu0
        %v1447 = vpop.f32.mrb[0].mxu0
        %1448 = vdwg.mxu0
        %v1449 = vmax.f32 %v1444, 0.0
        %v1450 = vpack.c.bf16 %v1449, %v1449
        %v1451 = vld [vmem:[#allocation18] sm:$0xf]
        %v1452 = vld [vmem:[#allocation18 + $0x4] sm:$0xf]
        %v1453 = vld [vmem:[#allocation18 + $0x8] sm:$0xf]
        %v1454 = vld [vmem:[#allocation18 + $0xc] sm:$0xf]
        %v1455 = vld [vmem:[#allocation20] sm:$0x1]
        %v1457 = vlaneseq
        %v1458 = vshrl.u32 %v1457, 7
        %v1459 = vsub.s32 0, %v1458
        %v1460 = vrot.slane %v1455, %v1459
        %v1466 = vunpack.c.l.b16 %v1451
        %v1467 = vunpack.c.l.b16 %v1452
        %v1468 = vunpack.c.l.b16 %v1453
        %v1469 = vunpack.c.l.b16 %v1454
        %v1470 = vpack.c.b16 %v1467, %v1466
        %v1471 = vpack.c.b16 %v1469, %v1468
        %v1475 = vsel %vm642, %v1450, 0
        %1477 = vmatprep.subr.bf16.mxu0 0
        %1478 = vmatpush1.bf16.msra.mxu0 %v1470
        %1479 = vmatprep.subr.bf16.mxu0 0
        %1480 = vmatpush1.bf16.msra.mxu0 %v1471
        %1481 = vmatprep.subr.bf16.mxu0 0
        %1482 = vmatpush1.bf16.msra.mxu0 0
        %1483 = vmatprep.subr.bf16.mxu0 0
        %1484 = vmatpush1.bf16.msra.mxu0 0
        %1485 = vmatprep.subr.bf16.mxu0 0
        %1486 = vmatpush1.bf16.msra.mxu0 0
        %1487 = vmatprep.subr.bf16.mxu0 0
        %1488 = vmatpush1.bf16.msra.mxu0 0
        %1489 = vmatprep.subr.bf16.mxu0 0
        %1490 = vmatpush1.bf16.msra.mxu0 0
        %1491 = vmatprep.subr.bf16.mxu0 0
        %1492 = vmatpush1.bf16.msra.mxu0 0
        %1493 = vmatprep.subr.bf16.mxu0 0
        %1494 = vmatpush1.bf16.msra.mxu0 0
        %1495 = vmatprep.subr.bf16.mxu0 0
        %1496 = vmatpush1.bf16.msra.mxu0 0
        %1497 = vmatprep.subr.bf16.mxu0 0
        %1498 = vmatpush1.bf16.msra.mxu0 0
        %1499 = vmatprep.subr.bf16.mxu0 0
        %1500 = vmatpush1.bf16.msra.mxu0 0
        %1501 = vmatprep.subr.bf16.mxu0 0
        %1502 = vmatpush1.bf16.msra.mxu0 0
        %1503 = vmatprep.subr.bf16.mxu0 0
        %1504 = vmatpush1.bf16.msra.mxu0 0
        %1505 = vmatprep.subr.bf16.mxu0 0
        %1506 = vmatpush1.bf16.msra.mxu0 0
        %1507 = vmatprep.subr.bf16.mxu0 0
        %1508 = vmatpush1.bf16.msra.mxu0 0
        %1509 = vmatprep.mubr.bf16.mxu0 0
        %1510 = vmatmul.mubr.bf16.gmra.mrb[0].mxu0 %v1475
        %v1511 = vpop.f32.mrb[0].mxu0
        %v1512 = vadd.f32 %v1460, %v1511
        %v1513 = vpop.f32.mrb[0].mxu0
        %v1514 = vpop.f32.mrb[0].mxu0
        %v1515 = vpop.f32.mrb[0].mxu0
        %1516 = vdwg.mxu0
        %v1517 = vadd.f32 %v1512, %v1381
        %v1518 = vld [vmem:[#allocation21] sm:$0x1]
        %v1519 = vld [vmem:[#allocation23] sm:$0x1]
        %v1520 = vsel %vm642, %v1517, 0.0
        %1521 = vadd.xlane.f32.xlu0 %v1520
        %v1522 = vpop.xlane.xlu0 %1521
        %v1523 = vmul.f32 %v1522, %v1357
        %v1524 = vsub.f32 %v1517, %v1523
        %v1525 = vmul.f32 %v1524, %v1524
        %v1526 = vsel %vm642, %v1525, 0.0
        %1527 = vadd.xlane.f32.xlu0 %v1526
        %v1528 = vpop.xlane.xlu0 %1527
        %v1529 = vmul.f32 %v1528, %v1357
        %v1530 = vadd.f32 %v1529, 1e-05
        %v1531 = vrsqrt.pop %v1530
        %v1532 = vmul.f32 %v1524, %v1531
        %v1534 = vlaneseq
        %v1535 = vshrl.u32 %v1534, 7
        %v1536 = vsub.s32 0, %v1535
        %v1537 = vrot.slane %v1518, %v1536
        %v1539 = vmul.f32 %v1532, %v1537
        %v1541 = vlaneseq
        %v1542 = vshrl.u32 %v1541, 7
        %v1543 = vsub.s32 0, %v1542
        %v1544 = vrot.slane %v1519, %v1543
        %v1546 = vadd.f32 %v1539, %v1544
        %1547 = vst.msk [vmem:[%s615] sm:$0xff] %vm642, %v1546
        %s1548 = sand.u32 %s322, 1
        %s1549 = scalar_lea.sflag [#allocation5], %s1548
        %s1550 = sand.u32 %s322, 1
        %s1551 = smul.addr %s1550, 8
        %s1552 = scalar_lea.vmem [#allocation24], %s1551
        // Predicated region
        $region125: #{tpu_custom_call.1} parent=71 // pred_check
          %p1553 = pneg %p332
        $region126: #{tpu_custom_call.1} parent=71 // pred_check_branch
          %1555 = sbr.rel (%p1553) target = $region128
        $region127: #{tpu_custom_call.1} parent=71 // pred_region
          %s1557 = ssub.s32 128, 128
          %1558 = vsyncadd %s1549, %s1557
          %s1559 = smul.addr %s36, 128
          %s1560 = scalar_lea.hbm %s13, %s1559
          %s1562 = sshll.u32 %s1552, 4
          %s1563 = int_to_ptr.vmem [resolvable:$true] %s1562
          %1565 = dma.vmem_to_hbm [thread:$0]  %s1563, 128, %s1560, %s1549
        $region128: #{tpu_custom_call.1} parent=71 // pred_fallthru
          _
      $region72: #{tpu_custom_call.1} parent=5 // pred_fallthru
        _
      %p1566 = scmp.le.s32.totalorder 2, %s31
      // Predicated region
      $region129: #{tpu_custom_call.1} parent=5 // pred_check
        %p1567 = pneg %p1566
      $region130: #{tpu_custom_call.1} parent=5 // pred_check_branch
        %1569 = sbr.rel (%p1567) target = $region132
      $region131: #{tpu_custom_call.1} parent=5 // pred_region
        %s1570 = ssub.s32 %s31, 2
        // Predicated region
        $region133: #{tpu_custom_call.1} parent=131 // pred_check
          %p1571 = pneg %p338
        $region134: #{tpu_custom_call.1} parent=131 // pred_check_branch
          %1573 = sbr.rel (%p1571) target = $region136
        $region135: #{tpu_custom_call.1} parent=131 // pred_region
          %s1574 = sand.u32 %s323, 1
          %s1575 = scalar_lea.sflag [#allocation5], %s1574
          %s1576 = sand.u32 %s323, 1
          %s1577 = smul.addr %s1576, 8
          %s1578 = scalar_lea.vmem [#allocation24], %s1577
          %1579 = dma.done %s1575, 128
        $region136: #{tpu_custom_call.1} parent=131 // pred_fallthru
          _
      $region132: #{tpu_custom_call.1} parent=5 // pred_fallthru
        _
    $region6: #{tpu_custom_call.1} parent=1 // loop_footer
      %s35 = sadd.s32 1, %s31
    $region7: #{tpu_custom_call.1} parent=1 // loop_footer_branch
      %30 = sbr.rel target = $region3
    $region8: #{tpu_custom_call.1} parent=1 // loop_exit
      _
    %1580 = vsyncpa [#allocation4], 1
    %s1581 = scalar_lea.sflag [#allocation4], 1
    %1582 = vsyncpa %s1581, 1
    %1583 = vsyncpa [#allocation7], 1
    %1584 = vsyncpa [#allocation10], 1
    %1585 = vsyncpa [#allocation13], 1
    %1586 = vsyncpa [#allocation16], 1
    %1587 = vsyncpa [#allocation19], 1
    %1588 = vsyncpa [#allocation22], 1
    %1589 = vsyncpa [#allocation5], 1
    %s1590 = scalar_lea.sflag [#allocation5], 1
    %1591 = vsyncpa %s1590, 1

</llo_original>
